<compile_context>
chip_gen: v5e
topology: v5e:2x2
jax: 0.10.0
libtpu: 0.0.40
codegen_flags: <defaults>
</compile_context>

<pallas_src>
import math

import jax
import jax.numpy as jnp
from jax.experimental import pallas as pl
from jax.experimental.pallas import tpu as pltpu

# ---- small synthetic DistilBERT config (module structure, not pretrained sizes) ----
B, S = 2, 8            # batch, sequence length
D, H = 32, 4           # hidden dim, attention heads
HD = D // H            # head dim
F = 4 * D              # FFN inner dim
L = 2                  # transformer layers
V = 100                # vocab size
C = 7                  # num_classes (PSAModel default = 7)
EPS = 1e-12            # DistilBERT LayerNorm eps
B_TILE = 1             # batch tile per grid step (kernel assumes 1: attention must
                       # never mix tokens of different batch elements within a tile)


def _layer_norm(x, g, b):
    mu = jnp.mean(x, axis=-1, keepdims=True)
    var = jnp.mean(jnp.square(x - mu), axis=-1, keepdims=True)
    return (x - mu) * jax.lax.rsqrt(var + EPS) * g + b


def _gelu(x):
    # TODO(synk): HF DistilBERT uses exact erf-GELU; tanh-approx GELU used here
    # for guaranteed Mosaic elementwise lowering (max deviation ~1e-3).
    c = math.sqrt(2.0 / math.pi)
    return 0.5 * x * (1.0 + jnp.tanh(c * (x + 0.044715 * x * x * x)))


def _softmax(x):
    # Exact softmax (used by the pure-JAX reference only).
    m = jnp.max(x, axis=-1, keepdims=True)
    e = jnp.exp(x - m)
    return e / jnp.sum(e, axis=-1, keepdims=True)


def distilbert_kernel(emb_ref, maskb_ref,
                      eg_ref, eb_ref,
                      wqkv_ref, bqkv_ref, wo_ref, bo_ref, sag_ref, sab_ref,
                      w1_ref, b1_ref, w2_ref, b2_ref, og_ref, ob_ref,
                      pw_ref, pb_ref, cw_ref, cb_ref,
                      out_ref, h_scratch):
    l = pl.program_id(1)

    # First layer step of this batch tile: embedding LayerNorm into residual scratch.
    @pl.when(l == 0)
    def _():
        h_scratch[...] = _layer_norm(emb_ref[0], eg_ref[...], eb_ref[...])

    h = h_scratch[...]                                            # (S, D) f32

    # Additive mask bias hoisted to one broadcast per layer: (1,1,S) -> (H,S,S).
    bias = jnp.broadcast_to(maskb_ref[...], (H, S, S))

    # ---- fused, head-major QKV projection: one batched MXU op, bf16 operands ----
    # wqkv is (3H, D, HD); g = [q heads | k heads | v heads]; 1/sqrt(HD) is folded
    # into the q weight/bias rows at prepare_params time.
    h_b = jnp.broadcast_to(h.astype(jnp.bfloat16)[None], (3 * H, S, D))
    qkv = jnp.einsum('gtd,gde->gte', h_b, wqkv_ref[0],
                     preferred_element_type=jnp.float32) + bqkv_ref[0]   # (3H,S,HD) f32

    # Leading-axis slab slices (no lane relayout), cast to bf16 for the MXU.
    q = qkv[0:H].astype(jnp.bfloat16)
    k = qkv[H:2 * H].astype(jnp.bfloat16)
    v = qkv[2 * H:3 * H].astype(jnp.bfloat16)

    # ---- attention batched over heads (head axis leading / sublane-cheap) ----
    s = jnp.einsum('hqe,hke->hqk', q, k,
                   preferred_element_type=jnp.float32) + bias            # (H,S,S) f32
    m = jnp.max(s, axis=-1, keepdims=True)
    e = jnp.exp(s - m)
    p = e * pl.reciprocal(jnp.sum(e, axis=-1, keepdims=True), approx=True)
    ctx = jnp.einsum('hqk,hke->hqe', p.astype(jnp.bfloat16), v,
                     preferred_element_type=jnp.float32)                 # (H,S,HD)

    # concat(heads) @ W_o == sum_h ctx_h @ W_o[h]: batched matmul + major-axis reduce.
    attn = jnp.einsum('hqe,heo->hqo', ctx.astype(jnp.bfloat16), wo_ref[0],
                      preferred_element_type=jnp.float32).sum(axis=0) + bo_ref[0]
    sa = _layer_norm(attn + h, sag_ref[0], sab_ref[0])

    # ---- feed-forward (bf16 operands, f32 accumulation / f32 activations) ----
    x1 = _gelu(jnp.dot(sa.astype(jnp.bfloat16), w1_ref[0],
                       preferred_element_type=jnp.float32) + b1_ref[0])
    x2 = jnp.dot(x1.astype(jnp.bfloat16), w2_ref[0],
                 preferred_element_type=jnp.float32) + b2_ref[0]
    h_new = _layer_norm(x2 + sa, og_ref[0], ob_ref[0])
    h_scratch[...] = h_new

    # Last layer step: classification head on the [CLS] token (row 0 of this tile).
    @pl.when(l == L - 1)
    def _():
        cls = h_new[0:1, :].astype(jnp.bfloat16)                         # (1, D)
        pre = jnp.dot(cls, pw_ref[...],
                      preferred_element_type=jnp.float32) + pb_ref[...]
        pre = jnp.maximum(pre, 0.0)
        logits = jnp.dot(pre.astype(jnp.bfloat16), cw_ref[...],
                         preferred_element_type=jnp.float32) + cb_ref[...]
        out_ref[...] = logits.reshape(1, B_TILE, C)


def _batch_spec(shape):
    nd = len(shape)
    return pl.BlockSpec((B_TILE,) + tuple(shape[1:]),
                        lambda bt, l, _nd=nd: (bt,) + (0,) * (_nd - 1))


def _const_spec(shape):
    nd = len(shape)
    return pl.BlockSpec(tuple(shape), lambda bt, l, _nd=nd: (0,) * _nd)


def _layer_spec(shape):
    nd = len(shape)
    return pl.BlockSpec((1,) + tuple(shape[1:]),
                        lambda bt, l, _nd=nd: (l,) + (0,) * (_nd - 1))


_LAYER_PARAMS = frozenset(('wqkv_h', 'bqkv_h', 'wo_h', 'bo', 'sa_g', 'sa_b',
                           'w1', 'b1', 'w2', 'b2', 'out_g', 'out_b'))
_PARAM_ORDER = ('emb_g', 'emb_b',
                'wqkv_h', 'bqkv_h', 'wo_h', 'bo', 'sa_g', 'sa_b',
                'w1', 'b1', 'w2', 'b2', 'out_g', 'out_b',
                'pre_w', 'pre_b', 'cls_w', 'cls_b')


def prepare_params(p):
    """One-time weight transform: fold q-scale, head-major fused QKV, bf16 MXU weights."""
    scale = 1.0 / math.sqrt(HD)
    prep = dict(p)

    def head_major(w):                                   # (L, D, D) -> (L, H, D, HD)
        return w.reshape(L, D, H, HD).transpose(0, 2, 1, 3)

    def head_major_b(b):                                 # (L, 1, D) -> (L, H, 1, HD)
        return b.reshape(L, H, 1, HD)

    prep['wqkv_h'] = jnp.concatenate(
        [head_major(p['wq'] * scale), head_major(p['wk']), head_major(p['wv'])],
        axis=1).astype(jnp.bfloat16)                     # (L, 3H, D, HD) bf16
    prep['bqkv_h'] = jnp.concatenate(
        [head_major_b(p['bq'] * scale), head_major_b(p['bk']), head_major_b(p['bv'])],
        axis=1).astype(jnp.float32)                      # (L, 3H, 1, HD) f32
    prep['wo_h'] = p['wo'].reshape(L, H, HD, D).astype(jnp.bfloat16)     # (L, H, HD, D)
    for n in ('w1', 'w2', 'pre_w', 'cls_w'):
        prep[n] = p[n].astype(jnp.bfloat16)              # bf16 streamed / MXU weights
    return prep


def psa_forward(input_ids, mask, prep):
    # Embedding gather (glue) — word + position embeddings; dropout is eval-identity.
    emb = jnp.take(prep['word_emb'], input_ids, axis=0) + prep['pos_emb'][None, :S, :]
    emb = emb.astype(jnp.float32)
    if mask is None:
        mask = jnp.ones((B, S), jnp.float32)
    # Additive attention-mask bias (large finite negative, NOT -inf / finfo.min).
    mask_bias = ((mask.astype(jnp.float32) - 1.0) * 1e30)[:, None, :]    # (B, 1, S)

    inputs = [emb, mask_bias] + [prep[n] for n in _PARAM_ORDER]
    in_specs = [_batch_spec(emb.shape), _batch_spec(mask_bias.shape)]
    for n in _PARAM_ORDER:
        in_specs.append(_layer_spec(prep[n].shape) if n in _LAYER_PARAMS
                        else _const_spec(prep[n].shape))

    bt_grid = B // B_TILE
    out = pl.pallas_call(
        distilbert_kernel,
        out_shape=jax.ShapeDtypeStruct((bt_grid, B_TILE, C), jnp.float32),
        grid=(bt_grid, L),
        in_specs=in_specs,
        out_specs=pl.BlockSpec((1, B_TILE, C), lambda bt, l: (bt, 0, 0)),
        scratch_shapes=[pltpu.VMEM((B_TILE * S, D), jnp.float32)],
        compiler_params=pltpu.CompilerParams(
            dimension_semantics=("parallel", "arbitrary"),
            vmem_limit_bytes=32 * 1024 * 1024),
    )(*inputs)
    return out.reshape(B, C)


def init_params(key):
    keys = iter(jax.random.split(key, 16))

    def nrm(shape, scale=0.05):
        return (scale * jax.random.normal(next(keys), shape)).astype(jnp.float32)

    return dict(
        word_emb=nrm((V, D)),
        pos_emb=nrm((S, D)),
        emb_g=jnp.ones((1, D), jnp.float32), emb_b=jnp.zeros((1, D), jnp.float32),
        wq=nrm((L, D, D)), bq=jnp.zeros((L, 1, D), jnp.float32),
        wk=nrm((L, D, D)), bk=jnp.zeros((L, 1, D), jnp.float32),
        wv=nrm((L, D, D)), bv=jnp.zeros((L, 1, D), jnp.float32),
        wo=nrm((L, D, D)), bo=jnp.zeros((L, 1, D), jnp.float32),
        sa_g=jnp.ones((L, 1, D), jnp.float32), sa_b=jnp.zeros((L, 1, D), jnp.float32),
        w1=nrm((L, D, F)), b1=jnp.zeros((L, 1, F), jnp.float32),
        w2=nrm((L, F, D)), b2=jnp.zeros((L, 1, D), jnp.float32),
        out_g=jnp.ones((L, 1, D), jnp.float32), out_b=jnp.zeros((L, 1, D), jnp.float32),
        pre_w=nrm((D, D)), pre_b=jnp.zeros((1, D), jnp.float32),
        cls_w=nrm((D, C)), cls_b=jnp.zeros((1, C), jnp.float32),
    )


def reference_forward(input_ids, mask, p):
    """Pure-JAX f32 reference with identical math (for correctness check)."""
    emb = jnp.take(p['word_emb'], input_ids, axis=0) + p['pos_emb'][None, :S, :]
    h = _layer_norm(emb, p['emb_g'], p['emb_b'])
    for l in range(L):
        q = h @ p['wq'][l] + p['bq'][l]
        k = h @ p['wk'][l] + p['bk'][l]
        v = h @ p['wv'][l] + p['bv'][l]

        def split(x):
            return x.reshape(B, S, H, HD).transpose(0, 2, 1, 3)

        qh = split(q) / math.sqrt(HD)
        kh, vh = split(k), split(v)
        scores = jnp.einsum('bhqd,bhkd->bhqk', qh, kh)
        m = (mask > 0.5)[:, None, None, :]
        scores = jnp.where(m, scores, jnp.finfo(jnp.float32).min)
        probs = _softmax(scores)
        ctx = jnp.einsum('bhqk,bhkd->bhqd', probs, vh).transpose(0, 2, 1, 3).reshape(B, S, D)
        sa = _layer_norm(ctx @ p['wo'][l] + p['bo'][l] + h, p['sa_g'][l], p['sa_b'][l])
        x1 = _gelu(sa @ p['w1'][l] + p['b1'][l])
        h = _layer_norm(x1 @ p['w2'][l] + p['b2'][l] + sa, p['out_g'][l], p['out_b'][l])
    cls = h[:, 0, :]
    pre = jnp.maximum(cls @ p['pre_w'] + p['pre_b'], 0.0)
    return pre @ p['cls_w'] + p['cls_b']


if __name__ == "__main__":
    key = jax.random.PRNGKey(0)
    pkey, ikey = jax.random.split(key)
    params = init_params(pkey)
    prep = prepare_params(params)

    input_ids = jax.random.randint(ikey, (B, S), 0, V, dtype=jnp.int32)
    mask = jnp.ones((B, S), jnp.float32).at[1, 6:].set(0.0)   # pad tail of 2nd sequence

    logits = psa_forward(input_ids, mask, prep)
    jax.block_until_ready(logits)

    ref = reference_forward(input_ids, mask, params)
    assert logits.shape == (B, C)
    # Tolerance re-derived for bf16 MXU operands (f32 accumulation) + EUP approx
    # reciprocal; estimated worst-case logit error ~5e-3 at these shapes.
    assert jnp.allclose(logits, ref, atol=3e-2, rtol=3e-2), (logits, ref)

    print("KERNEL_OK")
</pallas_src>

<mosaic_0001>
module attributes {stable_mosaic.version = 11 : i64} {
  func.func @distilbert_kernel(%arg0: i32, %arg1: i32, %arg2: memref<1x8x32xf32, #tpu.memory_space<vmem>>, %arg3: memref<1x1x8xf32, #tpu.memory_space<vmem>>, %arg4: memref<1x32xf32, #tpu.memory_space<vmem>>, %arg5: memref<1x32xf32, #tpu.memory_space<vmem>>, %arg6: memref<1x12x32x8xbf16, #tpu.memory_space<vmem>>, %arg7: memref<1x12x1x8xf32, #tpu.memory_space<vmem>>, %arg8: memref<1x4x8x32xbf16, #tpu.memory_space<vmem>>, %arg9: memref<1x1x32xf32, #tpu.memory_space<vmem>>, %arg10: memref<1x1x32xf32, #tpu.memory_space<vmem>>, %arg11: memref<1x1x32xf32, #tpu.memory_space<vmem>>, %arg12: memref<1x32x128xbf16, #tpu.memory_space<vmem>>, %arg13: memref<1x1x128xf32, #tpu.memory_space<vmem>>, %arg14: memref<1x128x32xbf16, #tpu.memory_space<vmem>>, %arg15: memref<1x1x32xf32, #tpu.memory_space<vmem>>, %arg16: memref<1x1x32xf32, #tpu.memory_space<vmem>>, %arg17: memref<1x1x32xf32, #tpu.memory_space<vmem>>, %arg18: memref<32x32xbf16, #tpu.memory_space<vmem>>, %arg19: memref<1x32xf32, #tpu.memory_space<vmem>>, %arg20: memref<32x7xbf16, #tpu.memory_space<vmem>>, %arg21: memref<1x7xf32, #tpu.memory_space<vmem>>, %arg22: memref<1x1x7xf32, #tpu.memory_space<vmem>>, %arg23: memref<8x32xf32, #tpu.memory_space<vmem>>) attributes {dimension_semantics = [#tpu.dimension_semantics<parallel>, #tpu.dimension_semantics<arbitrary>], iteration_bounds = array<i64: 2, 2>, scalar_prefetch = 0 : i64, scratch_operands = 1 : i64, tpu.core_type = #tpu.core_type<tc>, window_params = [{transform_indices = @transform_0, window_bounds = array<i64: 1, 8, 32>}, {transform_indices = @transform_1, window_bounds = array<i64: 1, 1, 8>}, {pipeline_mode = #tpu.pipeline_mode<synchronous>, transform_indices = @transform_2, window_bounds = array<i64: 1, 32>}, {pipeline_mode = #tpu.pipeline_mode<synchronous>, transform_indices = @transform_3, window_bounds = array<i64: 1, 32>}, {transform_indices = @transform_4, window_bounds = array<i64: 1, 12, 32, 8>}, {transform_indices = @transform_5, window_bounds = array<i64: 1, 12, 1, 8>}, {transform_indices = @transform_6, window_bounds = array<i64: 1, 4, 8, 32>}, {transform_indices = @transform_7, window_bounds = array<i64: 1, 1, 32>}, {transform_indices = @transform_8, window_bounds = array<i64: 1, 1, 32>}, {transform_indices = @transform_9, window_bounds = array<i64: 1, 1, 32>}, {transform_indices = @transform_10, window_bounds = array<i64: 1, 32, 128>}, {transform_indices = @transform_11, window_bounds = array<i64: 1, 1, 128>}, {transform_indices = @transform_12, window_bounds = array<i64: 1, 128, 32>}, {transform_indices = @transform_13, window_bounds = array<i64: 1, 1, 32>}, {transform_indices = @transform_14, window_bounds = array<i64: 1, 1, 32>}, {transform_indices = @transform_15, window_bounds = array<i64: 1, 1, 32>}, {pipeline_mode = #tpu.pipeline_mode<synchronous>, transform_indices = @transform_16, window_bounds = array<i64: 32, 32>}, {pipeline_mode = #tpu.pipeline_mode<synchronous>, transform_indices = @transform_17, window_bounds = array<i64: 1, 32>}, {pipeline_mode = #tpu.pipeline_mode<synchronous>, transform_indices = @transform_18, window_bounds = array<i64: 32, 7>}, {pipeline_mode = #tpu.pipeline_mode<synchronous>, transform_indices = @transform_19, window_bounds = array<i64: 1, 7>}, {transform_indices = @transform_20, window_bounds = array<i64: 1, 1, 7>}]} {
    %c0_i32 = arith.constant 0 : i32
    %0 = arith.cmpi eq, %arg1, %c0_i32 : i32
    %1 = arith.extui %0 : i1 to i32
    %c0_i32_0 = arith.constant 0 : i32
    %2 = arith.cmpi ne, %1, %c0_i32_0 : i32
    scf.if %2 {
      %c0_69 = arith.constant 0 : index
      %c0_70 = arith.constant 0 : index
      %c0_71 = arith.constant 0 : index
      %134 = vector.load %arg2[%c0_69, %c0_70, %c0_71] : memref<1x8x32xf32, #tpu.memory_space<vmem>>, vector<1x8x32xf32>
      %135 = vector.shape_cast %134 : vector<1x8x32xf32> to vector<8x32xf32>
      %c0_72 = arith.constant 0 : index
      %c0_73 = arith.constant 0 : index
      %136 = vector.load %arg4[%c0_72, %c0_73] : memref<1x32xf32, #tpu.memory_space<vmem>>, vector<1x32xf32>
      %c0_74 = arith.constant 0 : index
      %c0_75 = arith.constant 0 : index
      %137 = vector.load %arg5[%c0_74, %c0_75] : memref<1x32xf32, #tpu.memory_space<vmem>>, vector<1x32xf32>
      %cst_76 = arith.constant dense<0.000000e+00> : vector<8xf32>
      %138 = vector.multi_reduction <add>, %135, %cst_76 [1] : vector<8x32xf32> to vector<8xf32>
      %139 = vector.shape_cast %138 : vector<8xf32> to vector<8x1xf32>
      %cst_77 = arith.constant 3.200000e+01 : f32
      %140 = vector.broadcast %cst_77 : f32 to vector<8x1xf32>
      %141 = arith.divf %139, %140 : vector<8x1xf32>
      %142 = vector.broadcast %141 : vector<8x1xf32> to vector<8x32xf32>
      %143 = arith.subf %135, %142 : vector<8x32xf32>
      %144 = arith.mulf %143, %143 : vector<8x32xf32>
      %cst_78 = arith.constant dense<0.000000e+00> : vector<8xf32>
      %145 = vector.multi_reduction <add>, %144, %cst_78 [1] : vector<8x32xf32> to vector<8xf32>
      %146 = vector.shape_cast %145 : vector<8xf32> to vector<8x1xf32>
      %cst_79 = arith.constant 3.200000e+01 : f32
      %147 = vector.broadcast %cst_79 : f32 to vector<8x1xf32>
      %148 = arith.divf %146, %147 : vector<8x1xf32>
      %149 = vector.broadcast %141 : vector<8x1xf32> to vector<8x32xf32>
      %150 = arith.subf %135, %149 : vector<8x32xf32>
      %cst_80 = arith.constant 9.99999996E-13 : f32
      %151 = vector.broadcast %cst_80 : f32 to vector<8x1xf32>
      %152 = arith.addf %148, %151 : vector<8x1xf32>
      %153 = math.rsqrt %152 : vector<8x1xf32>
      %154 = vector.broadcast %153 : vector<8x1xf32> to vector<8x32xf32>
      %155 = arith.mulf %150, %154 : vector<8x32xf32>
      %156 = vector.broadcast %136 : vector<1x32xf32> to vector<8x32xf32>
      %157 = arith.mulf %155, %156 : vector<8x32xf32>
      %158 = vector.broadcast %137 : vector<1x32xf32> to vector<8x32xf32>
      %159 = arith.addf %157, %158 : vector<8x32xf32>
      %c0_81 = arith.constant 0 : index
      %c0_82 = arith.constant 0 : index
      %160 = vector.load %arg23[%c0_81, %c0_82] : memref<8x32xf32, #tpu.memory_space<vmem>>, vector<8x32xf32>
      tpu.vector_store %arg23[%c0_81, %c0_82], %159 {strides = array<i32>} : memref<8x32xf32, #tpu.memory_space<vmem>>, vector<8x32xf32>,
    } else {
    }
    %c0 = arith.constant 0 : index
    %c0_1 = arith.constant 0 : index
    %3 = vector.load %arg23[%c0, %c0_1] : memref<8x32xf32, #tpu.memory_space<vmem>>, vector<8x32xf32>
    %c0_2 = arith.constant 0 : index
    %c0_3 = arith.constant 0 : index
    %c0_4 = arith.constant 0 : index
    %4 = vector.load %arg3[%c0_2, %c0_3, %c0_4] : memref<1x1x8xf32, #tpu.memory_space<vmem>>, vector<1x1x8xf32>
    %5 = vector.shape_cast %4 : vector<1x1x8xf32> to vector<1x1x8xf32>
    %6 = vector.broadcast %5 : vector<1x1x8xf32> to vector<4x8x8xf32>
    %7 = arith.truncf %3 : vector<8x32xf32> to vector<8x32xbf16>
    %8 = vector.shape_cast %7 : vector<8x32xbf16> to vector<1x8x32xbf16>
    %9 = vector.shape_cast %8 : vector<1x8x32xbf16> to vector<1x8x32xbf16>
    %10 = vector.broadcast %9 : vector<1x8x32xbf16> to vector<12x8x32xbf16>
    %c0_5 = arith.constant 0 : index
    %c0_6 = arith.constant 0 : index
    %c0_7 = arith.constant 0 : index
    %c0_8 = arith.constant 0 : index
    %11 = vector.load %arg6[%c0_5, %c0_6, %c0_7, %c0_8] : memref<1x12x32x8xbf16, #tpu.memory_space<vmem>>, vector<1x12x32x8xbf16>
    %12 = vector.shape_cast %11 : vector<1x12x32x8xbf16> to vector<12x32x8xbf16>
    "tpu.trace_start"() <{level = 10 : i32, message = "gtd,gde->gte"}> : () -> ()
    %cst = arith.constant dense<0.000000e+00> : vector<12x8x8xf32>
    %13 = tpu.matmul %10, %12, %cst {dimension_numbers = #tpu.dot_dimension_numbers<[2], [1], [1], [2], [0, 0, 0, 1, 1, 2], [0], [0]>} : vector<12x8x32xbf16>, vector<12x32x8xbf16>, vector<12x8x8xf32> -> vector<12x8x8xf32>
    "tpu.trace_stop"() : () -> ()
    %c0_9 = arith.constant 0 : index
    %c0_10 = arith.constant 0 : index
    %c0_11 = arith.constant 0 : index
    %c0_12 = arith.constant 0 : index
    %14 = vector.load %arg7[%c0_9, %c0_10, %c0_11, %c0_12] : memref<1x12x1x8xf32, #tpu.memory_space<vmem>>, vector<1x12x1x8xf32>
    %15 = vector.shape_cast %14 : vector<1x12x1x8xf32> to vector<12x1x8xf32>
    %16 = vector.broadcast %15 : vector<12x1x8xf32> to vector<12x8x8xf32>
    %17 = arith.addf %13, %16 : vector<12x8x8xf32>
    %18 = vector.extract_strided_slice %17 {offsets = [0, 0, 0], sizes = [4, 8, 8], strides = [1, 1, 1]} : vector<12x8x8xf32> to vector<4x8x8xf32>
    %19 = arith.truncf %18 : vector<4x8x8xf32> to vector<4x8x8xbf16>
    %20 = vector.extract_strided_slice %17 {offsets = [4, 0, 0], sizes = [4, 8, 8], strides = [1, 1, 1]} : vector<12x8x8xf32> to vector<4x8x8xf32>
    %21 = arith.truncf %20 : vector<4x8x8xf32> to vector<4x8x8xbf16>
    %22 = vector.extract_strided_slice %17 {offsets = [8, 0, 0], sizes = [4, 8, 8], strides = [1, 1, 1]} : vector<12x8x8xf32> to vector<4x8x8xf32>
    %23 = arith.truncf %22 : vector<4x8x8xf32> to vector<4x8x8xbf16>
    "tpu.trace_start"() <{level = 10 : i32, message = "hqe,hke->hqk"}> : () -> ()
    %cst_13 = arith.constant dense<0.000000e+00> : vector<4x8x8xf32>
    %24 = tpu.matmul %19, %21, %cst_13 {dimension_numbers = #tpu.dot_dimension_numbers<[2], [2], [1], [1], [0, 0, 0, 1, 1, 1], [0], [0]>} : vector<4x8x8xbf16>, vector<4x8x8xbf16>, vector<4x8x8xf32> -> vector<4x8x8xf32>
    "tpu.trace_stop"() : () -> ()
    %25 = arith.addf %24, %6 : vector<4x8x8xf32>
    %cst_14 = arith.constant dense<0xFF800000> : vector<4x8xf32>
    %26 = vector.multi_reduction <maximumf>, %25, %cst_14 [2] : vector<4x8x8xf32> to vector<4x8xf32>
    %27 = vector.shape_cast %26 : vector<4x8xf32> to vector<4x8x1xf32>
    %28 = vector.broadcast %27 : vector<4x8x1xf32> to vector<4x8x8xf32>
    %29 = arith.subf %25, %28 : vector<4x8x8xf32>
    %30 = math.exp %29 : vector<4x8x8xf32>
    %cst_15 = arith.constant dense<0.000000e+00> : vector<4x8xf32>
    %31 = vector.multi_reduction <add>, %30, %cst_15 [2] : vector<4x8x8xf32> to vector<4x8xf32>
    %32 = vector.shape_cast %31 : vector<4x8xf32> to vector<4x8x1xf32>
    %33 = tpu.reciprocal %32 {approx = true} : vector<4x8x1xf32> -> vector<4x8x1xf32>
    %34 = vector.broadcast %33 : vector<4x8x1xf32> to vector<4x8x8xf32>
    %35 = arith.mulf %30, %34 : vector<4x8x8xf32>
    %36 = arith.truncf %35 : vector<4x8x8xf32> to vector<4x8x8xbf16>
    "tpu.trace_start"() <{level = 10 : i32, message = "hqk,hke->hqe"}> : () -> ()
    %cst_16 = arith.constant dense<0.000000e+00> : vector<4x8x8xf32>
    %37 = tpu.matmul %36, %23, %cst_16 {dimension_numbers = #tpu.dot_dimension_numbers<[2], [1], [1], [2], [0, 0, 0, 1, 1, 2], [0], [0]>} : vector<4x8x8xbf16>, vector<4x8x8xbf16>, vector<4x8x8xf32> -> vector<4x8x8xf32>
    "tpu.trace_stop"() : () -> ()
    %38 = arith.truncf %37 : vector<4x8x8xf32> to vector<4x8x8xbf16>
    %c0_17 = arith.constant 0 : index
    %c0_18 = arith.constant 0 : index
    %c0_19 = arith.constant 0 : index
    %c0_20 = arith.constant 0 : index
    %39 = vector.load %arg8[%c0_17, %c0_18, %c0_19, %c0_20] : memref<1x4x8x32xbf16, #tpu.memory_space<vmem>>, vector<1x4x8x32xbf16>
    %40 = vector.shape_cast %39 : vector<1x4x8x32xbf16> to vector<4x8x32xbf16>
    "tpu.trace_start"() <{level = 10 : i32, message = "hqe,heo->hqo"}> : () -> ()
    %cst_21 = arith.constant dense<0.000000e+00> : vector<4x8x32xf32>
    %41 = tpu.matmul %38, %40, %cst_21 {dimension_numbers = #tpu.dot_dimension_numbers<[2], [1], [1], [2], [0, 0, 0, 1, 1, 2], [0], [0]>} : vector<4x8x8xbf16>, vector<4x8x32xbf16>, vector<4x8x32xf32> -> vector<4x8x32xf32>
    "tpu.trace_stop"() : () -> ()
    %cst_22 = arith.constant dense<0.000000e+00> : vector<8x32xf32>
    %42 = vector.multi_reduction <add>, %41, %cst_22 [0] : vector<4x8x32xf32> to vector<8x32xf32>
    %c0_23 = arith.constant 0 : index
    %c0_24 = arith.constant 0 : index
    %c0_25 = arith.constant 0 : index
    %43 = vector.load %arg9[%c0_23, %c0_24, %c0_25] : memref<1x1x32xf32, #tpu.memory_space<vmem>>, vector<1x1x32xf32>
    %44 = vector.shape_cast %43 : vector<1x1x32xf32> to vector<1x32xf32>
    %45 = vector.broadcast %44 : vector<1x32xf32> to vector<8x32xf32>
    %46 = arith.addf %42, %45 : vector<8x32xf32>
    %47 = arith.addf %46, %3 : vector<8x32xf32>
    %c0_26 = arith.constant 0 : index
    %c0_27 = arith.constant 0 : index
    %c0_28 = arith.constant 0 : index
    %48 = vector.load %arg10[%c0_26, %c0_27, %c0_28] : memref<1x1x32xf32, #tpu.memory_space<vmem>>, vector<1x1x32xf32>
    %49 = vector.shape_cast %48 : vector<1x1x32xf32> to vector<1x32xf32>
    %c0_29 = arith.constant 0 : index
    %c0_30 = arith.constant 0 : index
    %c0_31 = arith.constant 0 : index
    %50 = vector.load %arg11[%c0_29, %c0_30, %c0_31] : memref<1x1x32xf32, #tpu.memory_space<vmem>>, vector<1x1x32xf32>
    %51 = vector.shape_cast %50 : vector<1x1x32xf32> to vector<1x32xf32>
    %cst_32 = arith.constant dense<0.000000e+00> : vector<8xf32>
    %52 = vector.multi_reduction <add>, %47, %cst_32 [1] : vector<8x32xf32> to vector<8xf32>
    %53 = vector.shape_cast %52 : vector<8xf32> to vector<8x1xf32>
    %cst_33 = arith.constant 3.200000e+01 : f32
    %54 = vector.broadcast %cst_33 : f32 to vector<8x1xf32>
    %55 = arith.divf %53, %54 : vector<8x1xf32>
    %56 = vector.broadcast %55 : vector<8x1xf32> to vector<8x32xf32>
    %57 = arith.subf %47, %56 : vector<8x32xf32>
    %58 = arith.mulf %57, %57 : vector<8x32xf32>
    %cst_34 = arith.constant dense<0.000000e+00> : vector<8xf32>
    %59 = vector.multi_reduction <add>, %58, %cst_34 [1] : vector<8x32xf32> to vector<8xf32>
    %60 = vector.shape_cast %59 : vector<8xf32> to vector<8x1xf32>
    %cst_35 = arith.constant 3.200000e+01 : f32
    %61 = vector.broadcast %cst_35 : f32 to vector<8x1xf32>
    %62 = arith.divf %60, %61 : vector<8x1xf32>
    %63 = vector.broadcast %55 : vector<8x1xf32> to vector<8x32xf32>
    %64 = arith.subf %47, %63 : vector<8x32xf32>
    %cst_36 = arith.constant 9.99999996E-13 : f32
    %65 = vector.broadcast %cst_36 : f32 to vector<8x1xf32>
    %66 = arith.addf %62, %65 : vector<8x1xf32>
    %67 = math.rsqrt %66 : vector<8x1xf32>
    %68 = vector.broadcast %67 : vector<8x1xf32> to vector<8x32xf32>
    %69 = arith.mulf %64, %68 : vector<8x32xf32>
    %70 = vector.broadcast %49 : vector<1x32xf32> to vector<8x32xf32>
    %71 = arith.mulf %69, %70 : vector<8x32xf32>
    %72 = vector.broadcast %51 : vector<1x32xf32> to vector<8x32xf32>
    %73 = arith.addf %71, %72 : vector<8x32xf32>
    %74 = arith.truncf %73 : vector<8x32xf32> to vector<8x32xbf16>
    %c0_37 = arith.constant 0 : index
    %c0_38 = arith.constant 0 : index
    %c0_39 = arith.constant 0 : index
    %75 = vector.load %arg12[%c0_37, %c0_38, %c0_39] : memref<1x32x128xbf16, #tpu.memory_space<vmem>>, vector<1x32x128xbf16>
    %76 = vector.shape_cast %75 : vector<1x32x128xbf16> to vector<32x128xbf16>
    %cst_40 = arith.constant dense<0.000000e+00> : vector<8x128xf32>
    %77 = tpu.matmul %74, %76, %cst_40 {dimension_numbers = #tpu.dot_dimension_numbers<[1], [0], [0], [1], [0, 0, 1, 1], [], []>} : vector<8x32xbf16>, vector<32x128xbf16>, vector<8x128xf32> -> vector<8x128xf32>
    %c0_41 = arith.constant 0 : index
    %c0_42 = arith.constant 0 : index
    %c0_43 = arith.constant 0 : index
    %78 = vector.load %arg13[%c0_41, %c0_42, %c0_43] : memref<1x1x128xf32, #tpu.memory_space<vmem>>, vector<1x1x128xf32>
    %79 = vector.shape_cast %78 : vector<1x1x128xf32> to vector<1x128xf32>
    %80 = vector.broadcast %79 : vector<1x128xf32> to vector<8x128xf32>
    %81 = arith.addf %77, %80 : vector<8x128xf32>
    %cst_44 = arith.constant 5.000000e-01 : f32
    %82 = vector.broadcast %cst_44 : f32 to vector<8x128xf32>
    %83 = arith.mulf %82, %81 : vector<8x128xf32>
    %cst_45 = arith.constant 4.471500e-02 : f32
    %84 = vector.broadcast %cst_45 : f32 to vector<8x128xf32>
    %85 = arith.mulf %84, %81 : vector<8x128xf32>
    %86 = arith.mulf %85, %81 : vector<8x128xf32>
    %87 = arith.mulf %86, %81 : vector<8x128xf32>
    %88 = arith.addf %81, %87 : vector<8x128xf32>
    %cst_46 = arith.constant 0.797884583 : f32
    %89 = vector.broadcast %cst_46 : f32 to vector<8x128xf32>
    %90 = arith.mulf %89, %88 : vector<8x128xf32>
    %91 = math.tanh %90 : vector<8x128xf32>
    %cst_47 = arith.constant 1.000000e+00 : f32
    %92 = vector.broadcast %cst_47 : f32 to vector<8x128xf32>
    %93 = arith.addf %92, %91 : vector<8x128xf32>
    %94 = arith.mulf %83, %93 : vector<8x128xf32>
    %95 = arith.truncf %94 : vector<8x128xf32> to vector<8x128xbf16>
    %c0_48 = arith.constant 0 : index
    %c0_49 = arith.constant 0 : index
    %c0_50 = arith.constant 0 : index
    %96 = vector.load %arg14[%c0_48, %c0_49, %c0_50] : memref<1x128x32xbf16, #tpu.memory_space<vmem>>, vector<1x128x32xbf16>
    %97 = vector.shape_cast %96 : vector<1x128x32xbf16> to vector<128x32xbf16>
    %cst_51 = arith.constant dense<0.000000e+00> : vector<8x32xf32>
    %98 = tpu.matmul %95, %97, %cst_51 {dimension_numbers = #tpu.dot_dimension_numbers<[1], [0], [0], [1], [0, 0, 1, 1], [], []>} : vector<8x128xbf16>, vector<128x32xbf16>, vector<8x32xf32> -> vector<8x32xf32>
    %c0_52 = arith.constant 0 : index
    %c0_53 = arith.constant 0 : index
    %c0_54 = arith.constant 0 : index
    %99 = vector.load %arg15[%c0_52, %c0_53, %c0_54] : memref<1x1x32xf32, #tpu.memory_space<vmem>>, vector<1x1x32xf32>
    %100 = vector.shape_cast %99 : vector<1x1x32xf32> to vector<1x32xf32>
    %101 = vector.broadcast %100 : vector<1x32xf32> to vector<8x32xf32>
    %102 = arith.addf %98, %101 : vector<8x32xf32>
    %103 = arith.addf %102, %73 : vector<8x32xf32>
    %c0_55 = arith.constant 0 : index
    %c0_56 = arith.constant 0 : index
    %c0_57 = arith.constant 0 : index
    %104 = vector.load %arg16[%c0_55, %c0_56, %c0_57] : memref<1x1x32xf32, #tpu.memory_space<vmem>>, vector<1x1x32xf32>
    %105 = vector.shape_cast %104 : vector<1x1x32xf32> to vector<1x32xf32>
    %c0_58 = arith.constant 0 : index
    %c0_59 = arith.constant 0 : index
    %c0_60 = arith.constant 0 : index
    %106 = vector.load %arg17[%c0_58, %c0_59, %c0_60] : memref<1x1x32xf32, #tpu.memory_space<vmem>>, vector<1x1x32xf32>
    %107 = vector.shape_cast %106 : vector<1x1x32xf32> to vector<1x32xf32>
    %cst_61 = arith.constant dense<0.000000e+00> : vector<8xf32>
    %108 = vector.multi_reduction <add>, %103, %cst_61 [1] : vector<8x32xf32> to vector<8xf32>
    %109 = vector.shape_cast %108 : vector<8xf32> to vector<8x1xf32>
    %cst_62 = arith.constant 3.200000e+01 : f32
    %110 = vector.broadcast %cst_62 : f32 to vector<8x1xf32>
    %111 = arith.divf %109, %110 : vector<8x1xf32>
    %112 = vector.broadcast %111 : vector<8x1xf32> to vector<8x32xf32>
    %113 = arith.subf %103, %112 : vector<8x32xf32>
    %114 = arith.mulf %113, %113 : vector<8x32xf32>
    %cst_63 = arith.constant dense<0.000000e+00> : vector<8xf32>
    %115 = vector.multi_reduction <add>, %114, %cst_63 [1] : vector<8x32xf32> to vector<8xf32>
    %116 = vector.shape_cast %115 : vector<8xf32> to vector<8x1xf32>
    %cst_64 = arith.constant 3.200000e+01 : f32
    %117 = vector.broadcast %cst_64 : f32 to vector<8x1xf32>
    %118 = arith.divf %116, %117 : vector<8x1xf32>
    %119 = vector.broadcast %111 : vector<8x1xf32> to vector<8x32xf32>
    %120 = arith.subf %103, %119 : vector<8x32xf32>
    %cst_65 = arith.constant 9.99999996E-13 : f32
    %121 = vector.broadcast %cst_65 : f32 to vector<8x1xf32>
    %122 = arith.addf %118, %121 : vector<8x1xf32>
    %123 = math.rsqrt %122 : vector<8x1xf32>
    %124 = vector.broadcast %123 : vector<8x1xf32> to vector<8x32xf32>
    %125 = arith.mulf %120, %124 : vector<8x32xf32>
    %126 = vector.broadcast %105 : vector<1x32xf32> to vector<8x32xf32>
    %127 = arith.mulf %125, %126 : vector<8x32xf32>
    %128 = vector.broadcast %107 : vector<1x32xf32> to vector<8x32xf32>
    %129 = arith.addf %127, %128 : vector<8x32xf32>
    %c0_66 = arith.constant 0 : index
    %c0_67 = arith.constant 0 : index
    %130 = vector.load %arg23[%c0_66, %c0_67] : memref<8x32xf32, #tpu.memory_space<vmem>>, vector<8x32xf32>
    tpu.vector_store %arg23[%c0_66, %c0_67], %129 {strides = array<i32>} : memref<8x32xf32, #tpu.memory_space<vmem>>, vector<8x32xf32>,
    %c1_i32 = arith.constant 1 : i32
    %131 = arith.cmpi eq, %arg1, %c1_i32 : i32
    %132 = arith.extui %131 : i1 to i32
    %c0_i32_68 = arith.constant 0 : i32
    %133 = arith.cmpi ne, %132, %c0_i32_68 : i32
    scf.if %133 {
      %134 = vector.extract_strided_slice %129 {offsets = [0, 0], sizes = [1, 32], strides = [1, 1]} : vector<8x32xf32> to vector<1x32xf32>
      %135 = arith.truncf %134 : vector<1x32xf32> to vector<1x32xbf16>
      %c0_69 = arith.constant 0 : index
      %c0_70 = arith.constant 0 : index
      %136 = vector.load %arg18[%c0_69, %c0_70] : memref<32x32xbf16, #tpu.memory_space<vmem>>, vector<32x32xbf16>
      %cst_71 = arith.constant dense<0.000000e+00> : vector<1x32xf32>
      %137 = tpu.matmul %135, %136, %cst_71 {dimension_numbers = #tpu.dot_dimension_numbers<[1], [0], [0], [1], [0, 0, 1, 1], [], []>} : vector<1x32xbf16>, vector<32x32xbf16>, vector<1x32xf32> -> vector<1x32xf32>
      %c0_72 = arith.constant 0 : index
      %c0_73 = arith.constant 0 : index
      %138 = vector.load %arg19[%c0_72, %c0_73] : memref<1x32xf32, #tpu.memory_space<vmem>>, vector<1x32xf32>
      %139 = arith.addf %137, %138 : vector<1x32xf32>
      %cst_74 = arith.constant 0.000000e+00 : f32
      %140 = vector.broadcast %cst_74 : f32 to vector<1x32xf32>
      %141 = arith.maximumf %139, %140 : vector<1x32xf32>
      %142 = arith.truncf %141 : vector<1x32xf32> to vector<1x32xbf16>
      %c0_75 = arith.constant 0 : index
      %c0_76 = arith.constant 0 : index
      %143 = vector.load %arg20[%c0_75, %c0_76] : memref<32x7xbf16, #tpu.memory_space<vmem>>, vector<32x7xbf16>
      %cst_77 = arith.constant dense<0.000000e+00> : vector<1x7xf32>
      %144 = tpu.matmul %142, %143, %cst_77 {dimension_numbers = #tpu.dot_dimension_numbers<[1], [0], [0], [1], [0, 0, 1, 1], [], []>} : vector<1x32xbf16>, vector<32x7xbf16>, vector<1x7xf32> -> vector<1x7xf32>
      %c0_78 = arith.constant 0 : index
      %c0_79 = arith.constant 0 : index
      %145 = vector.load %arg21[%c0_78, %c0_79] : memref<1x7xf32, #tpu.memory_space<vmem>>, vector<1x7xf32>
      %146 = arith.addf %144, %145 : vector<1x7xf32>
      %147 = vector.shape_cast %146 : vector<1x7xf32> to vector<1x1x7xf32>
      %c0_80 = arith.constant 0 : index
      %c0_81 = arith.constant 0 : index
      %c0_82 = arith.constant 0 : index
      %148 = vector.load %arg22[%c0_80, %c0_81, %c0_82] : memref<1x1x7xf32, #tpu.memory_space<vmem>>, vector<1x1x7xf32>
      tpu.vector_store %arg22[%c0_80, %c0_81, %c0_82], %147 {strides = array<i32>} : memref<1x1x7xf32, #tpu.memory_space<vmem>>, vector<1x1x7xf32>,
    } else {
    }
    return
  }
  func.func @transform_0(%arg0: i32, %arg1: i32) -> (i32, i32, i32) {
    %c0_i32 = arith.constant 0 : i32
    %c0_i32_0 = arith.constant 0 : i32
    %c0_i32_1 = arith.constant 0 : i32
    return %arg0, %c0_i32, %c0_i32_0 : i32, i32, i32
  }
  func.func @transform_1(%arg0: i32, %arg1: i32) -> (i32, i32, i32) {
    %c0_i32 = arith.constant 0 : i32
    %c0_i32_0 = arith.constant 0 : i32
    %c0_i32_1 = arith.constant 0 : i32
    return %arg0, %c0_i32, %c0_i32_0 : i32, i32, i32
  }
  func.func @transform_2(%arg0: i32, %arg1: i32) -> (i32, i32) {
    %c0_i32 = arith.constant 0 : i32
    %c0_i32_0 = arith.constant 0 : i32
    %c0_i32_1 = arith.constant 0 : i32
    return %c0_i32, %c0_i32_0 : i32, i32
  }
  func.func @transform_3(%arg0: i32, %arg1: i32) -> (i32, i32) {
    %c0_i32 = arith.constant 0 : i32
    %c0_i32_0 = arith.constant 0 : i32
    %c0_i32_1 = arith.constant 0 : i32
    return %c0_i32, %c0_i32_0 : i32, i32
  }
  func.func @transform_4(%arg0: i32, %arg1: i32) -> (i32, i32, i32, i32) {
    %c0_i32 = arith.constant 0 : i32
    %c0_i32_0 = arith.constant 0 : i32
    %c0_i32_1 = arith.constant 0 : i32
    %c0_i32_2 = arith.constant 0 : i32
    return %arg1, %c0_i32, %c0_i32_0, %c0_i32_1 : i32, i32, i32, i32
  }
  func.func @transform_5(%arg0: i32, %arg1: i32) -> (i32, i32, i32, i32) {
    %c0_i32 = arith.constant 0 : i32
    %c0_i32_0 = arith.constant 0 : i32
    %c0_i32_1 = arith.constant 0 : i32
    %c0_i32_2 = arith.constant 0 : i32
    return %arg1, %c0_i32, %c0_i32_0, %c0_i32_1 : i32, i32, i32, i32
  }
  func.func @transform_6(%arg0: i32, %arg1: i32) -> (i32, i32, i32, i32) {
    %c0_i32 = arith.constant 0 : i32
    %c0_i32_0 = arith.constant 0 : i32
    %c0_i32_1 = arith.constant 0 : i32
    %c0_i32_2 = arith.constant 0 : i32
    return %arg1, %c0_i32, %c0_i32_0, %c0_i32_1 : i32, i32, i32, i32
  }
  func.func @transform_7(%arg0: i32, %arg1: i32) -> (i32, i32, i32) {
    %c0_i32 = arith.constant 0 : i32
    %c0_i32_0 = arith.constant 0 : i32
    %c0_i32_1 = arith.constant 0 : i32
    return %arg1, %c0_i32, %c0_i32_0 : i32, i32, i32
  }
  func.func @transform_8(%arg0: i32, %arg1: i32) -> (i32, i32, i32) {
    %c0_i32 = arith.constant 0 : i32
    %c0_i32_0 = arith.constant 0 : i32
    %c0_i32_1 = arith.constant 0 : i32
    return %arg1, %c0_i32, %c0_i32_0 : i32, i32, i32
  }
  func.func @transform_9(%arg0: i32, %arg1: i32) -> (i32, i32, i32) {
    %c0_i32 = arith.constant 0 : i32
    %c0_i32_0 = arith.constant 0 : i32
    %c0_i32_1 = arith.constant 0 : i32
    return %arg1, %c0_i32, %c0_i32_0 : i32, i32, i32
  }
  func.func @transform_10(%arg0: i32, %arg1: i32) -> (i32, i32, i32) {
    %c0_i32 = arith.constant 0 : i32
    %c0_i32_0 = arith.constant 0 : i32
    %c0_i32_1 = arith.constant 0 : i32
    return %arg1, %c0_i32, %c0_i32_0 : i32, i32, i32
  }
  func.func @transform_11(%arg0: i32, %arg1: i32) -> (i32, i32, i32) {
    %c0_i32 = arith.constant 0 : i32
    %c0_i32_0 = arith.constant 0 : i32
    %c0_i32_1 = arith.constant 0 : i32
    return %arg1, %c0_i32, %c0_i32_0 : i32, i32, i32
  }
  func.func @transform_12(%arg0: i32, %arg1: i32) -> (i32, i32, i32) {
    %c0_i32 = arith.constant 0 : i32
    %c0_i32_0 = arith.constant 0 : i32
    %c0_i32_1 = arith.constant 0 : i32
    return %arg1, %c0_i32, %c0_i32_0 : i32, i32, i32
  }
  func.func @transform_13(%arg0: i32, %arg1: i32) -> (i32, i32, i32) {
    %c0_i32 = arith.constant 0 : i32
    %c0_i32_0 = arith.constant 0 : i32
    %c0_i32_1 = arith.constant 0 : i32
    return %arg1, %c0_i32, %c0_i32_0 : i32, i32, i32
  }
  func.func @transform_14(%arg0: i32, %arg1: i32) -> (i32, i32, i32) {
    %c0_i32 = arith.constant 0 : i32
    %c0_i32_0 = arith.constant 0 : i32
    %c0_i32_1 = arith.constant 0 : i32
    return %arg1, %c0_i32, %c0_i32_0 : i32, i32, i32
  }
  func.func @transform_15(%arg0: i32, %arg1: i32) -> (i32, i32, i32) {
    %c0_i32 = arith.constant 0 : i32
    %c0_i32_0 = arith.constant 0 : i32
    %c0_i32_1 = arith.constant 0 : i32
    return %arg1, %c0_i32, %c0_i32_0 : i32, i32, i32
  }
  func.func @transform_16(%arg0: i32, %arg1: i32) -> (i32, i32) {
    %c0_i32 = arith.constant 0 : i32
    %c0_i32_0 = arith.constant 0 : i32
    %c0_i32_1 = arith.constant 0 : i32
    return %c0_i32, %c0_i32_0 : i32, i32
  }
  func.func @transform_17(%arg0: i32, %arg1: i32) -> (i32, i32) {
    %c0_i32 = arith.constant 0 : i32
    %c0_i32_0 = arith.constant 0 : i32
    %c0_i32_1 = arith.constant 0 : i32
    return %c0_i32, %c0_i32_0 : i32, i32
  }
  func.func @transform_18(%arg0: i32, %arg1: i32) -> (i32, i32) {
    %c0_i32 = arith.constant 0 : i32
    %c0_i32_0 = arith.constant 0 : i32
    %c0_i32_1 = arith.constant 0 : i32
    return %c0_i32, %c0_i32_0 : i32, i32
  }
  func.func @transform_19(%arg0: i32, %arg1: i32) -> (i32, i32) {
    %c0_i32 = arith.constant 0 : i32
    %c0_i32_0 = arith.constant 0 : i32
    %c0_i32_1 = arith.constant 0 : i32
    return %c0_i32, %c0_i32_0 : i32, i32
  }
  func.func @transform_20(%arg0: i32, %arg1: i32) -> (i32, i32, i32) {
    %c0_i32 = arith.constant 0 : i32
    %c0_i32_0 = arith.constant 0 : i32
    %c0_i32_1 = arith.constant 0 : i32
    return %arg0, %c0_i32, %c0_i32_0 : i32, i32, i32
  }
}

</mosaic_0001>

<llo_original>
// kernel: tpu_custom_call.1
$region0: #{tpu_custom_call.1}
  #allocation0 [shape = 'u32[]', space=smem, size = 0x4, offset = 0x4, fixed_abs, tag = 'smem constant byte address 0x4 - core index']
  #allocation1 [shape = 'u32[72,128]{1,0:T(1,128)}', space=vmem, size = 0x9000, scoped, tag = 'internal scratch']
  #allocation2 [shape = 'f32[8,32]{1,0:T(8,128)}', space=vmem, size = 0x1000, scoped, tag = 'scratch operand']
  %s0 = inlined_call_operand.vmem [shape: f32[2,8,32], index: 0, kind: input, shape index: {}]
  %s1 = inlined_call_operand.vmem [shape: f32[2,1,8], index: 1, kind: input, shape index: {}]
  %s2 = inlined_call_operand.vmem [shape: f32[1,32], index: 2, kind: input, shape index: {}]
  %s3 = inlined_call_operand.vmem [shape: f32[1,32], index: 3, kind: input, shape index: {}]
  %s4 = inlined_call_operand.vmem [shape: bf16[2,12,32,8], index: 4, kind: input, shape index: {}]
  %s5 = inlined_call_operand.vmem [shape: f32[2,12,1,8], index: 5, kind: input, shape index: {}]
  %s6 = inlined_call_operand.vmem [shape: bf16[2,4,8,32], index: 6, kind: input, shape index: {}]
  %s7 = inlined_call_operand.vmem [shape: f32[2,1,32], index: 7, kind: input, shape index: {}]
  %s8 = inlined_call_operand.vmem [shape: f32[2,1,32], index: 8, kind: input, shape index: {}]
  %s9 = inlined_call_operand.vmem [shape: f32[2,1,32], index: 9, kind: input, shape index: {}]
  %s10 = inlined_call_operand.vmem [shape: bf16[2,32,128], index: 10, kind: input, shape index: {}]
  %s11 = inlined_call_operand.vmem [shape: f32[2,1,128], index: 11, kind: input, shape index: {}]
  %s12 = inlined_call_operand.vmem [shape: bf16[2,128,32], index: 12, kind: input, shape index: {}]
  %s13 = inlined_call_operand.vmem [shape: f32[2,1,32], index: 13, kind: input, shape index: {}]
  %s14 = inlined_call_operand.vmem [shape: f32[2,1,32], index: 14, kind: input, shape index: {}]
  %s15 = inlined_call_operand.vmem [shape: f32[2,1,32], index: 15, kind: input, shape index: {}]
  %s16 = inlined_call_operand.vmem [shape: bf16[32,32], index: 16, kind: input, shape index: {}]
  %s17 = inlined_call_operand.vmem [shape: f32[1,32], index: 17, kind: input, shape index: {}]
  %s18 = inlined_call_operand.vmem [shape: bf16[32,7], index: 18, kind: input, shape index: {}]
  %s19 = inlined_call_operand.vmem [shape: f32[1,7], index: 19, kind: input, shape index: {}]
  %s20 = inlined_call_operand.hbm [shape: f32[2,1,7], index: 20, kind: output, shape index: {}]
  %s21 = sld [smem:[#allocation0]]
  $region121: #{tpu_custom_call.1} parent=0
    _
  %s23 = ssub.s32 1, %s21
  %s24 = scalar_select 0, %s23, %s21
  $region1: #{tpu_custom_call.1} parent=0
    #allocation3 [shape = 'u8[1024]{0}', space=vmem, size = 0x400, scoped, tag = 'output window, operand 0']
    #allocation4 [shape = 's32[2]{0}', space=sflag, size = 0x8, scoped, tag = 'scoped memory for tpu_custom_call.1']
    %25 = vsyncpa [#allocation4], 0
    %s26 = scalar_lea.sflag [#allocation4], 1
    %27 = vsyncpa %s26, 0
    loop: start=0, step=1, limit=6
    $region2: #{tpu_custom_call.1} parent=1 // loop_pre_header
      _
    $region3: #{tpu_custom_call.1} parent=1 // loop_header
      %s29 = sphi 0, %s33
      %p30 = scmp.ge.s32.totalorder %s29, 6
      %s36 = sphi 0, %s48
      %s37 = sphi 0, %s44
      %s38 = sphi 0, %s36
      %s39 = sphi 0, %s37
      %s40 = sphi 0, %s38
      %s41 = sphi 0, %s39
      %s51 = sphi 0, %s53
      %s54 = sphi 0, %s51
      %s55 = sphi 0, %s54
      %s71 = sphi 0, %s55
      %s77 = sphi 0, %s79
      %s80 = sphi 0, %s77
      %s81 = sphi 0, %s80
      %s97 = sphi 0, %s81
      %s101 = sphi 0, %s101
      %s103 = sphi 0, %s101
      %s104 = sphi 0, %s103
      %s118 = sphi 0, %s104
      %s122 = sphi 0, %s122
      %s124 = sphi 0, %s122
      %s125 = sphi 0, %s124
      %s139 = sphi 0, %s125
      %s145 = sphi 0, %s147
      %s148 = sphi 0, %s145
      %s149 = sphi 0, %s148
      %s165 = sphi 0, %s149
      %s171 = sphi 0, %s173
      %s174 = sphi 0, %s171
      %s175 = sphi 0, %s174
      %s191 = sphi 0, %s175
      %s197 = sphi 0, %s199
      %s200 = sphi 0, %s197
      %s201 = sphi 0, %s200
      %s217 = sphi 0, %s201
      %s223 = sphi 0, %s225
      %s226 = sphi 0, %s223
      %s227 = sphi 0, %s226
      %s243 = sphi 0, %s227
      %s249 = sphi 0, %s251
      %s252 = sphi 0, %s249
      %s253 = sphi 0, %s252
      %s269 = sphi 0, %s253
      %s275 = sphi 0, %s277
      %s278 = sphi 0, %s275
      %s279 = sphi 0, %s278
      %s295 = sphi 0, %s279
      %s301 = sphi 0, %s303
      %s304 = sphi 0, %s301
      %s305 = sphi 0, %s304
      %s321 = sphi 0, %s305
      %s327 = sphi 0, %s329
      %s330 = sphi 0, %s327
      %s331 = sphi 0, %s330
      %s347 = sphi 0, %s331
      %s353 = sphi 0, %s355
      %s356 = sphi 0, %s353
      %s357 = sphi 0, %s356
      %s373 = sphi 0, %s357
      %s379 = sphi 0, %s381
      %s382 = sphi 0, %s379
      %s383 = sphi 0, %s382
      %s399 = sphi 0, %s383
      %s405 = sphi 0, %s407
      %s408 = sphi 0, %s405
      %s409 = sphi 0, %s408
      %s425 = sphi 0, %s409
      %s431 = sphi 0, %s433
      %s434 = sphi 0, %s431
      %s435 = sphi 0, %s434
      %s451 = sphi 0, %s435
      %s455 = sphi 0, %s455
      %s457 = sphi 0, %s455
      %s458 = sphi 0, %s457
      %s472 = sphi 0, %s458
      %s476 = sphi 0, %s476
      %s478 = sphi 0, %s476
      %s479 = sphi 0, %s478
      %s493 = sphi 0, %s479
      %s497 = sphi 0, %s497
      %s499 = sphi 0, %s497
      %s500 = sphi 0, %s499
      %s514 = sphi 0, %s500
      %s518 = sphi 0, %s518
      %s520 = sphi 0, %s518
      %s521 = sphi 0, %s520
      %s535 = sphi 0, %s521
      %s541 = sphi 0, %s543
      %s544 = sphi 0, %s541
      %s545 = sphi 0, %s544
      %s561 = sphi 0, %s545
    $region4: #{tpu_custom_call.1} parent=1 // loop_header_branch
      %32 = sbr.rel (%p30) target = $region8
    $region5: #{tpu_custom_call.1} parent=1 // loop_body
      %s34 = ssub.s32 %s29, 1
      %s35 = ssub.s32 %s29, 2
      %s42 = sadd.s32 1, %s37
      %p43 = scmp.ge.s32.totalorder %s42, 2
      %s44 = scalar_select %p43, 0, %s42
      %s45 = sadd.s32 1, %s36
      %s46 = scalar_select %p43, %s45, %s36
      %p47 = scmp.ge.s32.totalorder %s46, 2
      %s48 = scalar_select %p47, 0, %s46
      %s49 = ssub.s32 %s36, %s48
      %p50 = scmp.eq.s32.totalorder %s49, 0
      %s52 = sadd.s32 %s51, 1
      %s53 = scalar_select %p50, %s51, %s52
      %p56 = pneg %p50
      %p57 = scmp.eq.s32.totalorder %s29, 3
      %p58 = por %p56, %p57
      %p59 = scmp.ne.s32.totalorder %s51, %s54
      %p60 = scmp.eq.s32.totalorder %s29, 0
      %p61 = por %p59, %p60
      %p62 = scmp.ne.s32.totalorder %s51, %s54
      %p63 = scmp.eq.s32.totalorder %s34, 3
      %p64 = por %p62, %p63
      %p65 = scmp.ne.s32.totalorder %s54, %s55
      %p66 = scmp.eq.s32.totalorder %s34, 0
      %p67 = por %p65, %p66
      %p68 = scmp.ne.s32.totalorder %s54, %s55
      %p69 = scmp.eq.s32.totalorder %s35, 3
      %p70 = por %p68, %p69
      %p72 = scmp.ne.s32.totalorder %s55, %s71
      %p73 = scmp.eq.s32.totalorder %s35, 0
      %p74 = por %p72, %p73
      %s75 = ssub.s32 %s36, %s48
      %p76 = scmp.eq.s32.totalorder %s75, 0
      %s78 = sadd.s32 %s77, 1
      %s79 = scalar_select %p76, %s77, %s78
      %p82 = pneg %p76
      %p83 = scmp.eq.s32.totalorder %s29, 3
      %p84 = por %p82, %p83
      %p85 = scmp.ne.s32.totalorder %s77, %s80
      %p86 = scmp.eq.s32.totalorder %s29, 0
      %p87 = por %p85, %p86
      %p88 = scmp.ne.s32.totalorder %s77, %s80
      %p89 = scmp.eq.s32.totalorder %s34, 3
      %p90 = por %p88, %p89
      %p91 = scmp.ne.s32.totalorder %s80, %s81
      %p92 = scmp.eq.s32.totalorder %s34, 0
      %p93 = por %p91, %p92
      %p94 = scmp.ne.s32.totalorder %s80, %s81
      %p95 = scmp.eq.s32.totalorder %s35, 3
      %p96 = por %p94, %p95
      %p98 = scmp.ne.s32.totalorder %s81, %s97
      %p99 = scmp.eq.s32.totalorder %s35, 0
      %p100 = por %p98, %p99
      %s102 = sadd.s32 %s101, 1
      %p105 = scmp.eq.s32.totalorder %s29, 3
      %p106 = scmp.ne.s32.totalorder %s101, %s103
      %p107 = scmp.eq.s32.totalorder %s29, 0
      %p108 = por %p106, %p107
      %p109 = scmp.ne.s32.totalorder %s101, %s103
      %p110 = scmp.eq.s32.totalorder %s34, 3
      %p111 = por %p109, %p110
      %p112 = scmp.ne.s32.totalorder %s103, %s104
      %p113 = scmp.eq.s32.totalorder %s34, 0
      %p114 = por %p112, %p113
      %p115 = scmp.ne.s32.totalorder %s103, %s104
      %p116 = scmp.eq.s32.totalorder %s35, 3
      %p117 = por %p115, %p116
      %p119 = scmp.ne.s32.totalorder %s104, %s118
      %p120 = scmp.eq.s32.totalorder %s35, 0
      %p121 = por %p119, %p120
      %s123 = sadd.s32 %s122, 1
      %p126 = scmp.eq.s32.totalorder %s29, 3
      %p127 = scmp.ne.s32.totalorder %s122, %s124
      %p128 = scmp.eq.s32.totalorder %s29, 0
      %p129 = por %p127, %p128
      %p130 = scmp.ne.s32.totalorder %s122, %s124
      %p131 = scmp.eq.s32.totalorder %s34, 3
      %p132 = por %p130, %p131
      %p133 = scmp.ne.s32.totalorder %s124, %s125
      %p134 = scmp.eq.s32.totalorder %s34, 0
      %p135 = por %p133, %p134
      %p136 = scmp.ne.s32.totalorder %s124, %s125
      %p137 = scmp.eq.s32.totalorder %s35, 3
      %p138 = por %p136, %p137
      %p140 = scmp.ne.s32.totalorder %s125, %s139
      %p141 = scmp.eq.s32.totalorder %s35, 0
      %p142 = por %p140, %p141
      %s143 = ssub.s32 %s37, %s44
      %p144 = scmp.eq.s32.totalorder %s143, 0
      %s146 = sadd.s32 %s145, 1
      %s147 = scalar_select %p144, %s145, %s146
      %p150 = pneg %p144
      %p151 = scmp.eq.s32.totalorder %s29, 3
      %p152 = por %p150, %p151
      %p153 = scmp.ne.s32.totalorder %s145, %s148
      %p154 = scmp.eq.s32.totalorder %s29, 0
      %p155 = por %p153, %p154
      %p156 = scmp.ne.s32.totalorder %s145, %s148
      %p157 = scmp.eq.s32.totalorder %s34, 3
      %p158 = por %p156, %p157
      %p159 = scmp.ne.s32.totalorder %s148, %s149
      %p160 = scmp.eq.s32.totalorder %s34, 0
      %p161 = por %p159, %p160
      %p162 = scmp.ne.s32.totalorder %s148, %s149
      %p163 = scmp.eq.s32.totalorder %s35, 3
      %p164 = por %p162, %p163
      %p166 = scmp.ne.s32.totalorder %s149, %s165
      %p167 = scmp.eq.s32.totalorder %s35, 0
      %p168 = por %p166, %p167
      %s169 = ssub.s32 %s37, %s44
      %p170 = scmp.eq.s32.totalorder %s169, 0
      %s172 = sadd.s32 %s171, 1
      %s173 = scalar_select %p170, %s171, %s172
      %p176 = pneg %p170
      %p177 = scmp.eq.s32.totalorder %s29, 3
      %p178 = por %p176, %p177
      %p179 = scmp.ne.s32.totalorder %s171, %s174
      %p180 = scmp.eq.s32.totalorder %s29, 0
      %p181 = por %p179, %p180
      %p182 = scmp.ne.s32.totalorder %s171, %s174
      %p183 = scmp.eq.s32.totalorder %s34, 3
      %p184 = por %p182, %p183
      %p185 = scmp.ne.s32.totalorder %s174, %s175
      %p186 = scmp.eq.s32.totalorder %s34, 0
      %p187 = por %p185, %p186
      %p188 = scmp.ne.s32.totalorder %s174, %s175
      %p189 = scmp.eq.s32.totalorder %s35, 3
      %p190 = por %p188, %p189
      %p192 = scmp.ne.s32.totalorder %s175, %s191
      %p193 = scmp.eq.s32.totalorder %s35, 0
      %p194 = por %p192, %p193
      %s195 = ssub.s32 %s37, %s44
      %p196 = scmp.eq.s32.totalorder %s195, 0
      %s198 = sadd.s32 %s197, 1
      %s199 = scalar_select %p196, %s197, %s198
      %p202 = pneg %p196
      %p203 = scmp.eq.s32.totalorder %s29, 3
      %p204 = por %p202, %p203
      %p205 = scmp.ne.s32.totalorder %s197, %s200
      %p206 = scmp.eq.s32.totalorder %s29, 0
      %p207 = por %p205, %p206
      %p208 = scmp.ne.s32.totalorder %s197, %s200
      %p209 = scmp.eq.s32.totalorder %s34, 3
      %p210 = por %p208, %p209
      %p211 = scmp.ne.s32.totalorder %s200, %s201
      %p212 = scmp.eq.s32.totalorder %s34, 0
      %p213 = por %p211, %p212
      %p214 = scmp.ne.s32.totalorder %s200, %s201
      %p215 = scmp.eq.s32.totalorder %s35, 3
      %p216 = por %p214, %p215
      %p218 = scmp.ne.s32.totalorder %s201, %s217
      %p219 = scmp.eq.s32.totalorder %s35, 0
      %p220 = por %p218, %p219
      %s221 = ssub.s32 %s37, %s44
      %p222 = scmp.eq.s32.totalorder %s221, 0
      %s224 = sadd.s32 %s223, 1
      %s225 = scalar_select %p222, %s223, %s224
      %p228 = pneg %p222
      %p229 = scmp.eq.s32.totalorder %s29, 3
      %p230 = por %p228, %p229
      %p231 = scmp.ne.s32.totalorder %s223, %s226
      %p232 = scmp.eq.s32.totalorder %s29, 0
      %p233 = por %p231, %p232
      %p234 = scmp.ne.s32.totalorder %s223, %s226
      %p235 = scmp.eq.s32.totalorder %s34, 3
      %p236 = por %p234, %p235
      %p237 = scmp.ne.s32.totalorder %s226, %s227
      %p238 = scmp.eq.s32.totalorder %s34, 0
      %p239 = por %p237, %p238
      %p240 = scmp.ne.s32.totalorder %s226, %s227
      %p241 = scmp.eq.s32.totalorder %s35, 3
      %p242 = por %p240, %p241
      %p244 = scmp.ne.s32.totalorder %s227, %s243
      %p245 = scmp.eq.s32.totalorder %s35, 0
      %p246 = por %p244, %p245
      %s247 = ssub.s32 %s37, %s44
      %p248 = scmp.eq.s32.totalorder %s247, 0
      %s250 = sadd.s32 %s249, 1
      %s251 = scalar_select %p248, %s249, %s250
      %p254 = pneg %p248
      %p255 = scmp.eq.s32.totalorder %s29, 3
      %p256 = por %p254, %p255
      %p257 = scmp.ne.s32.totalorder %s249, %s252
      %p258 = scmp.eq.s32.totalorder %s29, 0
      %p259 = por %p257, %p258
      %p260 = scmp.ne.s32.totalorder %s249, %s252
      %p261 = scmp.eq.s32.totalorder %s34, 3
      %p262 = por %p260, %p261
      %p263 = scmp.ne.s32.totalorder %s252, %s253
      %p264 = scmp.eq.s32.totalorder %s34, 0
      %p265 = por %p263, %p264
      %p266 = scmp.ne.s32.totalorder %s252, %s253
      %p267 = scmp.eq.s32.totalorder %s35, 3
      %p268 = por %p266, %p267
      %p270 = scmp.ne.s32.totalorder %s253, %s269
      %p271 = scmp.eq.s32.totalorder %s35, 0
      %p272 = por %p270, %p271
      %s273 = ssub.s32 %s37, %s44
      %p274 = scmp.eq.s32.totalorder %s273, 0
      %s276 = sadd.s32 %s275, 1
      %s277 = scalar_select %p274, %s275, %s276
      %p280 = pneg %p274
      %p281 = scmp.eq.s32.totalorder %s29, 3
      %p282 = por %p280, %p281
      %p283 = scmp.ne.s32.totalorder %s275, %s278
      %p284 = scmp.eq.s32.totalorder %s29, 0
      %p285 = por %p283, %p284
      %p286 = scmp.ne.s32.totalorder %s275, %s278
      %p287 = scmp.eq.s32.totalorder %s34, 3
      %p288 = por %p286, %p287
      %p289 = scmp.ne.s32.totalorder %s278, %s279
      %p290 = scmp.eq.s32.totalorder %s34, 0
      %p291 = por %p289, %p290
      %p292 = scmp.ne.s32.totalorder %s278, %s279
      %p293 = scmp.eq.s32.totalorder %s35, 3
      %p294 = por %p292, %p293
      %p296 = scmp.ne.s32.totalorder %s279, %s295
      %p297 = scmp.eq.s32.totalorder %s35, 0
      %p298 = por %p296, %p297
      %s299 = ssub.s32 %s37, %s44
      %p300 = scmp.eq.s32.totalorder %s299, 0
      %s302 = sadd.s32 %s301, 1
      %s303 = scalar_select %p300, %s301, %s302
      %p306 = pneg %p300
      %p307 = scmp.eq.s32.totalorder %s29, 3
      %p308 = por %p306, %p307
      %p309 = scmp.ne.s32.totalorder %s301, %s304
      %p310 = scmp.eq.s32.totalorder %s29, 0
      %p311 = por %p309, %p310
      %p312 = scmp.ne.s32.totalorder %s301, %s304
      %p313 = scmp.eq.s32.totalorder %s34, 3
      %p314 = por %p312, %p313
      %p315 = scmp.ne.s32.totalorder %s304, %s305
      %p316 = scmp.eq.s32.totalorder %s34, 0
      %p317 = por %p315, %p316
      %p318 = scmp.ne.s32.totalorder %s304, %s305
      %p319 = scmp.eq.s32.totalorder %s35, 3
      %p320 = por %p318, %p319
      %p322 = scmp.ne.s32.totalorder %s305, %s321
      %p323 = scmp.eq.s32.totalorder %s35, 0
      %p324 = por %p322, %p323
      %s325 = ssub.s32 %s37, %s44
      %p326 = scmp.eq.s32.totalorder %s325, 0
      %s328 = sadd.s32 %s327, 1
      %s329 = scalar_select %p326, %s327, %s328
      %p332 = pneg %p326
      %p333 = scmp.eq.s32.totalorder %s29, 3
      %p334 = por %p332, %p333
      %p335 = scmp.ne.s32.totalorder %s327, %s330
      %p336 = scmp.eq.s32.totalorder %s29, 0
      %p337 = por %p335, %p336
      %p338 = scmp.ne.s32.totalorder %s327, %s330
      %p339 = scmp.eq.s32.totalorder %s34, 3
      %p340 = por %p338, %p339
      %p341 = scmp.ne.s32.totalorder %s330, %s331
      %p342 = scmp.eq.s32.totalorder %s34, 0
      %p343 = por %p341, %p342
      %p344 = scmp.ne.s32.totalorder %s330, %s331
      %p345 = scmp.eq.s32.totalorder %s35, 3
      %p346 = por %p344, %p345
      %p348 = scmp.ne.s32.totalorder %s331, %s347
      %p349 = scmp.eq.s32.totalorder %s35, 0
      %p350 = por %p348, %p349
      %s351 = ssub.s32 %s37, %s44
      %p352 = scmp.eq.s32.totalorder %s351, 0
      %s354 = sadd.s32 %s353, 1
      %s355 = scalar_select %p352, %s353, %s354
      %p358 = pneg %p352
      %p359 = scmp.eq.s32.totalorder %s29, 3
      %p360 = por %p358, %p359
      %p361 = scmp.ne.s32.totalorder %s353, %s356
      %p362 = scmp.eq.s32.totalorder %s29, 0
      %p363 = por %p361, %p362
      %p364 = scmp.ne.s32.totalorder %s353, %s356
      %p365 = scmp.eq.s32.totalorder %s34, 3
      %p366 = por %p364, %p365
      %p367 = scmp.ne.s32.totalorder %s356, %s357
      %p368 = scmp.eq.s32.totalorder %s34, 0
      %p369 = por %p367, %p368
      %p370 = scmp.ne.s32.totalorder %s356, %s357
      %p371 = scmp.eq.s32.totalorder %s35, 3
      %p372 = por %p370, %p371
      %p374 = scmp.ne.s32.totalorder %s357, %s373
      %p375 = scmp.eq.s32.totalorder %s35, 0
      %p376 = por %p374, %p375
      %s377 = ssub.s32 %s37, %s44
      %p378 = scmp.eq.s32.totalorder %s377, 0
      %s380 = sadd.s32 %s379, 1
      %s381 = scalar_select %p378, %s379, %s380
      %p384 = pneg %p378
      %p385 = scmp.eq.s32.totalorder %s29, 3
      %p386 = por %p384, %p385
      %p387 = scmp.ne.s32.totalorder %s379, %s382
      %p388 = scmp.eq.s32.totalorder %s29, 0
      %p389 = por %p387, %p388
      %p390 = scmp.ne.s32.totalorder %s379, %s382
      %p391 = scmp.eq.s32.totalorder %s34, 3
      %p392 = por %p390, %p391
      %p393 = scmp.ne.s32.totalorder %s382, %s383
      %p394 = scmp.eq.s32.totalorder %s34, 0
      %p395 = por %p393, %p394
      %p396 = scmp.ne.s32.totalorder %s382, %s383
      %p397 = scmp.eq.s32.totalorder %s35, 3
      %p398 = por %p396, %p397
      %p400 = scmp.ne.s32.totalorder %s383, %s399
      %p401 = scmp.eq.s32.totalorder %s35, 0
      %p402 = por %p400, %p401
      %s403 = ssub.s32 %s37, %s44
      %p404 = scmp.eq.s32.totalorder %s403, 0
      %s406 = sadd.s32 %s405, 1
      %s407 = scalar_select %p404, %s405, %s406
      %p410 = pneg %p404
      %p411 = scmp.eq.s32.totalorder %s29, 3
      %p412 = por %p410, %p411
      %p413 = scmp.ne.s32.totalorder %s405, %s408
      %p414 = scmp.eq.s32.totalorder %s29, 0
      %p415 = por %p413, %p414
      %p416 = scmp.ne.s32.totalorder %s405, %s408
      %p417 = scmp.eq.s32.totalorder %s34, 3
      %p418 = por %p416, %p417
      %p419 = scmp.ne.s32.totalorder %s408, %s409
      %p420 = scmp.eq.s32.totalorder %s34, 0
      %p421 = por %p419, %p420
      %p422 = scmp.ne.s32.totalorder %s408, %s409
      %p423 = scmp.eq.s32.totalorder %s35, 3
      %p424 = por %p422, %p423
      %p426 = scmp.ne.s32.totalorder %s409, %s425
      %p427 = scmp.eq.s32.totalorder %s35, 0
      %p428 = por %p426, %p427
      %s429 = ssub.s32 %s37, %s44
      %p430 = scmp.eq.s32.totalorder %s429, 0
      %s432 = sadd.s32 %s431, 1
      %s433 = scalar_select %p430, %s431, %s432
      %p436 = pneg %p430
      %p437 = scmp.eq.s32.totalorder %s29, 3
      %p438 = por %p436, %p437
      %p439 = scmp.ne.s32.totalorder %s431, %s434
      %p440 = scmp.eq.s32.totalorder %s29, 0
      %p441 = por %p439, %p440
      %p442 = scmp.ne.s32.totalorder %s431, %s434
      %p443 = scmp.eq.s32.totalorder %s34, 3
      %p444 = por %p442, %p443
      %p445 = scmp.ne.s32.totalorder %s434, %s435
      %p446 = scmp.eq.s32.totalorder %s34, 0
      %p447 = por %p445, %p446
      %p448 = scmp.ne.s32.totalorder %s434, %s435
      %p449 = scmp.eq.s32.totalorder %s35, 3
      %p450 = por %p448, %p449
      %p452 = scmp.ne.s32.totalorder %s435, %s451
      %p453 = scmp.eq.s32.totalorder %s35, 0
      %p454 = por %p452, %p453
      %s456 = sadd.s32 %s455, 1
      %p459 = scmp.eq.s32.totalorder %s29, 3
      %p460 = scmp.ne.s32.totalorder %s455, %s457
      %p461 = scmp.eq.s32.totalorder %s29, 0
      %p462 = por %p460, %p461
      %p463 = scmp.ne.s32.totalorder %s455, %s457
      %p464 = scmp.eq.s32.totalorder %s34, 3
      %p465 = por %p463, %p464
      %p466 = scmp.ne.s32.totalorder %s457, %s458
      %p467 = scmp.eq.s32.totalorder %s34, 0
      %p468 = por %p466, %p467
      %p469 = scmp.ne.s32.totalorder %s457, %s458
      %p470 = scmp.eq.s32.totalorder %s35, 3
      %p471 = por %p469, %p470
      %p473 = scmp.ne.s32.totalorder %s458, %s472
      %p474 = scmp.eq.s32.totalorder %s35, 0
      %p475 = por %p473, %p474
      %s477 = sadd.s32 %s476, 1
      %p480 = scmp.eq.s32.totalorder %s29, 3
      %p481 = scmp.ne.s32.totalorder %s476, %s478
      %p482 = scmp.eq.s32.totalorder %s29, 0
      %p483 = por %p481, %p482
      %p484 = scmp.ne.s32.totalorder %s476, %s478
      %p485 = scmp.eq.s32.totalorder %s34, 3
      %p486 = por %p484, %p485
      %p487 = scmp.ne.s32.totalorder %s478, %s479
      %p488 = scmp.eq.s32.totalorder %s34, 0
      %p489 = por %p487, %p488
      %p490 = scmp.ne.s32.totalorder %s478, %s479
      %p491 = scmp.eq.s32.totalorder %s35, 3
      %p492 = por %p490, %p491
      %p494 = scmp.ne.s32.totalorder %s479, %s493
      %p495 = scmp.eq.s32.totalorder %s35, 0
      %p496 = por %p494, %p495
      %s498 = sadd.s32 %s497, 1
      %p501 = scmp.eq.s32.totalorder %s29, 3
      %p502 = scmp.ne.s32.totalorder %s497, %s499
      %p503 = scmp.eq.s32.totalorder %s29, 0
      %p504 = por %p502, %p503
      %p505 = scmp.ne.s32.totalorder %s497, %s499
      %p506 = scmp.eq.s32.totalorder %s34, 3
      %p507 = por %p505, %p506
      %p508 = scmp.ne.s32.totalorder %s499, %s500
      %p509 = scmp.eq.s32.totalorder %s34, 0
      %p510 = por %p508, %p509
      %p511 = scmp.ne.s32.totalorder %s499, %s500
      %p512 = scmp.eq.s32.totalorder %s35, 3
      %p513 = por %p511, %p512
      %p515 = scmp.ne.s32.totalorder %s500, %s514
      %p516 = scmp.eq.s32.totalorder %s35, 0
      %p517 = por %p515, %p516
      %s519 = sadd.s32 %s518, 1
      %p522 = scmp.eq.s32.totalorder %s29, 3
      %p523 = scmp.ne.s32.totalorder %s518, %s520
      %p524 = scmp.eq.s32.totalorder %s29, 0
      %p525 = por %p523, %p524
      %p526 = scmp.ne.s32.totalorder %s518, %s520
      %p527 = scmp.eq.s32.totalorder %s34, 3
      %p528 = por %p526, %p527
      %p529 = scmp.ne.s32.totalorder %s520, %s521
      %p530 = scmp.eq.s32.totalorder %s34, 0
      %p531 = por %p529, %p530
      %p532 = scmp.ne.s32.totalorder %s520, %s521
      %p533 = scmp.eq.s32.totalorder %s35, 3
      %p534 = por %p532, %p533
      %p536 = scmp.ne.s32.totalorder %s521, %s535
      %p537 = scmp.eq.s32.totalorder %s35, 0
      %p538 = por %p536, %p537
      %s539 = ssub.s32 %s36, %s48
      %p540 = scmp.eq.s32.totalorder %s539, 0
      %s542 = sadd.s32 %s541, 1
      %s543 = scalar_select %p540, %s541, %s542
      %p546 = pneg %p540
      %p547 = scmp.eq.s32.totalorder %s29, 3
      %p548 = por %p546, %p547
      %p549 = scmp.ne.s32.totalorder %s541, %s544
      %p550 = scmp.eq.s32.totalorder %s29, 0
      %p551 = por %p549, %p550
      %p552 = scmp.ne.s32.totalorder %s541, %s544
      %p553 = scmp.eq.s32.totalorder %s34, 3
      %p554 = por %p552, %p553
      %p555 = scmp.ne.s32.totalorder %s544, %s545
      %p556 = scmp.eq.s32.totalorder %s34, 0
      %p557 = por %p555, %p556
      %p558 = scmp.ne.s32.totalorder %s544, %s545
      %p559 = scmp.eq.s32.totalorder %s35, 3
      %p560 = por %p558, %p559
      %p562 = scmp.ne.s32.totalorder %s545, %s561
      %p563 = scmp.eq.s32.totalorder %s35, 0
      %p564 = por %p562, %p563
      %p565 = scmp.le.s32.totalorder 1, %s29
      %p566 = scmp.lt.s32.totalorder %s29, 5
      %p567 = pnand %p565, %p566
      %p568 = pneg %p567
      // Predicated region
      $region9: #{tpu_custom_call.1} parent=5 // pred_check
        _
      $region10: #{tpu_custom_call.1} parent=5 // pred_check_branch
        %570 = sbr.rel (%p567) target = $region12
      $region11: #{tpu_custom_call.1} parent=5 // pred_region
        %s571 = ssub.s32 %s29, 1
        // Predicated region
        $region13: #{tpu_custom_call.1} parent=11 // pred_check
          %p572 = pneg %p114
        $region14: #{tpu_custom_call.1} parent=11 // pred_check_branch
          %574 = sbr.rel (%p572) target = $region16
        $region15: #{tpu_custom_call.1} parent=11 // pred_region
          _
        $region16: #{tpu_custom_call.1} parent=11 // pred_fallthru
          _
        // Predicated region
        $region17: #{tpu_custom_call.1} parent=11 // pred_check
          %p575 = pneg %p135
        $region18: #{tpu_custom_call.1} parent=11 // pred_check_branch
          %577 = sbr.rel (%p575) target = $region20
        $region19: #{tpu_custom_call.1} parent=11 // pred_region
          _
        $region20: #{tpu_custom_call.1} parent=11 // pred_fallthru
          _
        // Predicated region
        $region21: #{tpu_custom_call.1} parent=11 // pred_check
          %p578 = pneg %p468
        $region22: #{tpu_custom_call.1} parent=11 // pred_check_branch
          %580 = sbr.rel (%p578) target = $region24
        $region23: #{tpu_custom_call.1} parent=11 // pred_region
          _
        $region24: #{tpu_custom_call.1} parent=11 // pred_fallthru
          _
        // Predicated region
        $region25: #{tpu_custom_call.1} parent=11 // pred_check
          %p581 = pneg %p489
        $region26: #{tpu_custom_call.1} parent=11 // pred_check_branch
          %583 = sbr.rel (%p581) target = $region28
        $region27: #{tpu_custom_call.1} parent=11 // pred_region
          _
        $region28: #{tpu_custom_call.1} parent=11 // pred_fallthru
          _
        // Predicated region
        $region29: #{tpu_custom_call.1} parent=11 // pred_check
          %p584 = pneg %p510
        $region30: #{tpu_custom_call.1} parent=11 // pred_check_branch
          %586 = sbr.rel (%p584) target = $region32
        $region31: #{tpu_custom_call.1} parent=11 // pred_region
          _
        $region32: #{tpu_custom_call.1} parent=11 // pred_fallthru
          _
        // Predicated region
        $region33: #{tpu_custom_call.1} parent=11 // pred_check
          %p587 = pneg %p531
        $region34: #{tpu_custom_call.1} parent=11 // pred_check_branch
          %589 = sbr.rel (%p587) target = $region36
        $region35: #{tpu_custom_call.1} parent=11 // pred_region
          _
        $region36: #{tpu_custom_call.1} parent=11 // pred_fallthru
          _
      $region12: #{tpu_custom_call.1} parent=5 // pred_fallthru
        _
      %p590 = scmp.lt.s32.totalorder %s29, 4
      // Predicated region
      $region37: #{tpu_custom_call.1} parent=5 // pred_check
        %p591 = pneg %p590
      $region38: #{tpu_custom_call.1} parent=5 // pred_check_branch
        %593 = sbr.rel (%p591) target = $region40
      $region39: #{tpu_custom_call.1} parent=5 // pred_region
        // Predicated region
        $region41: #{tpu_custom_call.1} parent=39 // pred_check
          %p594 = pneg %p61
        $region42: #{tpu_custom_call.1} parent=39 // pred_check_branch
          %596 = sbr.rel (%p594) target = $region44
        $region43: #{tpu_custom_call.1} parent=39 // pred_region
          %p597 = scmp.lt.s32.totalorder %s36, 1
          %s598 = scalar_select %p597, %s36, 1
          %s599 = smul.addr %s598, 8
          %s600 = scalar_lea.vmem %s0, %s599
        $region44: #{tpu_custom_call.1} parent=39 // pred_fallthru
          _
        // Predicated region
        $region45: #{tpu_custom_call.1} parent=39 // pred_check
          %p601 = pneg %p87
        $region46: #{tpu_custom_call.1} parent=39 // pred_check_branch
          %603 = sbr.rel (%p601) target = $region48
        $region47: #{tpu_custom_call.1} parent=39 // pred_region
          %p604 = scmp.lt.s32.totalorder %s36, 1
          %s605 = scalar_select %p604, %s36, 1
          %s606 = scalar_lea.vmem %s1, %s605
        $region48: #{tpu_custom_call.1} parent=39 // pred_fallthru
          _
        // Predicated region
        $region49: #{tpu_custom_call.1} parent=39 // pred_check
          %p607 = pneg %p155
        $region50: #{tpu_custom_call.1} parent=39 // pred_check_branch
          %609 = sbr.rel (%p607) target = $region52
        $region51: #{tpu_custom_call.1} parent=39 // pred_region
          %p610 = scmp.lt.s32.totalorder %s37, 1
          %s611 = scalar_select %p610, %s37, 1
          %s612 = smul.addr %s611, 48
          %s613 = smul.addr %s612, 4
          %s614 = scalar_lea.vmem %s4, %s613
        $region52: #{tpu_custom_call.1} parent=39 // pred_fallthru
          _
        // Predicated region
        $region53: #{tpu_custom_call.1} parent=39 // pred_check
          %p615 = pneg %p181
        $region54: #{tpu_custom_call.1} parent=39 // pred_check_branch
          %617 = sbr.rel (%p615) target = $region56
        $region55: #{tpu_custom_call.1} parent=39 // pred_region
          %p618 = scmp.lt.s32.totalorder %s37, 1
          %s619 = scalar_select %p618, %s37, 1
          %s620 = smul.addr %s619, 12
          %s621 = scalar_lea.vmem %s5, %s620
        $region56: #{tpu_custom_call.1} parent=39 // pred_fallthru
          _
        // Predicated region
        $region57: #{tpu_custom_call.1} parent=39 // pred_check
          %p622 = pneg %p207
        $region58: #{tpu_custom_call.1} parent=39 // pred_check_branch
          %624 = sbr.rel (%p622) target = $region60
        $region59: #{tpu_custom_call.1} parent=39 // pred_region
          %p625 = scmp.lt.s32.totalorder %s37, 1
          %s626 = scalar_select %p625, %s37, 1
          %s627 = smul.addr %s626, 4
          %s628 = smul.addr %s627, 4
          %s629 = scalar_lea.vmem %s6, %s628
        $region60: #{tpu_custom_call.1} parent=39 // pred_fallthru
          _
        // Predicated region
        $region61: #{tpu_custom_call.1} parent=39 // pred_check
          %p630 = pneg %p233
        $region62: #{tpu_custom_call.1} parent=39 // pred_check_branch
          %632 = sbr.rel (%p630) target = $region64
        $region63: #{tpu_custom_call.1} parent=39 // pred_region
          %p633 = scmp.lt.s32.totalorder %s37, 1
          %s634 = scalar_select %p633, %s37, 1
          %s635 = scalar_lea.vmem %s7, %s634
        $region64: #{tpu_custom_call.1} parent=39 // pred_fallthru
          _
        // Predicated region
        $region65: #{tpu_custom_call.1} parent=39 // pred_check
          %p636 = pneg %p259
        $region66: #{tpu_custom_call.1} parent=39 // pred_check_branch
          %638 = sbr.rel (%p636) target = $region68
        $region67: #{tpu_custom_call.1} parent=39 // pred_region
          %p639 = scmp.lt.s32.totalorder %s37, 1
          %s640 = scalar_select %p639, %s37, 1
          %s641 = scalar_lea.vmem %s8, %s640
        $region68: #{tpu_custom_call.1} parent=39 // pred_fallthru
          _
        // Predicated region
        $region69: #{tpu_custom_call.1} parent=39 // pred_check
          %p642 = pneg %p285
        $region70: #{tpu_custom_call.1} parent=39 // pred_check_branch
          %644 = sbr.rel (%p642) target = $region72
        $region71: #{tpu_custom_call.1} parent=39 // pred_region
          %p645 = scmp.lt.s32.totalorder %s37, 1
          %s646 = scalar_select %p645, %s37, 1
          %s647 = scalar_lea.vmem %s9, %s646
        $region72: #{tpu_custom_call.1} parent=39 // pred_fallthru
          _
        // Predicated region
        $region73: #{tpu_custom_call.1} parent=39 // pred_check
          %p648 = pneg %p311
        $region74: #{tpu_custom_call.1} parent=39 // pred_check_branch
          %650 = sbr.rel (%p648) target = $region76
        $region75: #{tpu_custom_call.1} parent=39 // pred_region
          %p651 = scmp.lt.s32.totalorder %s37, 1
          %s652 = scalar_select %p651, %s37, 1
          %s653 = smul.addr %s652, 4
          %s654 = smul.addr %s653, 4
          %s655 = scalar_lea.vmem %s10, %s654
        $region76: #{tpu_custom_call.1} parent=39 // pred_fallthru
          _
        // Predicated region
        $region77: #{tpu_custom_call.1} parent=39 // pred_check
          %p656 = pneg %p337
        $region78: #{tpu_custom_call.1} parent=39 // pred_check_branch
          %658 = sbr.rel (%p656) target = $region80
        $region79: #{tpu_custom_call.1} parent=39 // pred_region
          %p659 = scmp.lt.s32.totalorder %s37, 1
          %s660 = scalar_select %p659, %s37, 1
          %s661 = scalar_lea.vmem %s11, %s660
        $region80: #{tpu_custom_call.1} parent=39 // pred_fallthru
          _
        // Predicated region
        $region81: #{tpu_custom_call.1} parent=39 // pred_check
          %p662 = pneg %p363
        $region82: #{tpu_custom_call.1} parent=39 // pred_check_branch
          %664 = sbr.rel (%p662) target = $region84
        $region83: #{tpu_custom_call.1} parent=39 // pred_region
          %p665 = scmp.lt.s32.totalorder %s37, 1
          %s666 = scalar_select %p665, %s37, 1
          %s667 = smul.addr %s666, 16
          %s668 = smul.addr %s667, 4
          %s669 = scalar_lea.vmem %s12, %s668
        $region84: #{tpu_custom_call.1} parent=39 // pred_fallthru
          _
        // Predicated region
        $region85: #{tpu_custom_call.1} parent=39 // pred_check
          %p670 = pneg %p389
        $region86: #{tpu_custom_call.1} parent=39 // pred_check_branch
          %672 = sbr.rel (%p670) target = $region88
        $region87: #{tpu_custom_call.1} parent=39 // pred_region
          %p673 = scmp.lt.s32.totalorder %s37, 1
          %s674 = scalar_select %p673, %s37, 1
          %s675 = scalar_lea.vmem %s13, %s674
        $region88: #{tpu_custom_call.1} parent=39 // pred_fallthru
          _
        // Predicated region
        $region89: #{tpu_custom_call.1} parent=39 // pred_check
          %p676 = pneg %p415
        $region90: #{tpu_custom_call.1} parent=39 // pred_check_branch
          %678 = sbr.rel (%p676) target = $region92
        $region91: #{tpu_custom_call.1} parent=39 // pred_region
          %p679 = scmp.lt.s32.totalorder %s37, 1
          %s680 = scalar_select %p679, %s37, 1
          %s681 = scalar_lea.vmem %s14, %s680
        $region92: #{tpu_custom_call.1} parent=39 // pred_fallthru
          _
        // Predicated region
        $region93: #{tpu_custom_call.1} parent=39 // pred_check
          %p682 = pneg %p441
        $region94: #{tpu_custom_call.1} parent=39 // pred_check_branch
          %684 = sbr.rel (%p682) target = $region96
        $region95: #{tpu_custom_call.1} parent=39 // pred_region
          %p685 = scmp.lt.s32.totalorder %s37, 1
          %s686 = scalar_select %p685, %s37, 1
          %s687 = scalar_lea.vmem %s15, %s686
        $region96: #{tpu_custom_call.1} parent=39 // pred_fallthru
          _
      $region40: #{tpu_custom_call.1} parent=5 // pred_fallthru
        _
      %p688 = scmp.le.s32.totalorder 1, %s29
      %p689 = scmp.lt.s32.totalorder %s29, 5
      %p690 = pnand %p688, %p689
      %p691 = pneg %p690
      // Predicated region
      $region97: #{tpu_custom_call.1} parent=5 // pred_check
        _
      $region98: #{tpu_custom_call.1} parent=5 // pred_check_branch
        %693 = sbr.rel (%p690) target = $region100
      $region99: #{tpu_custom_call.1} parent=5 // pred_region
        %s694 = ssub.s32 %s29, 1
        %p695 = scmp.lt.s32.totalorder %s38, 1
        %s696 = scalar_select %p695, %s38, 1
        %s697 = smul.addr %s696, 8
        %s698 = scalar_lea.vmem %s0, %s697
        %p699 = pneg %p67
        %p700 = pneg %p64
        %p701 = scmp.lt.s32.totalorder %s38, 1
        %s702 = scalar_select %p701, %s38, 1
        %s703 = scalar_lea.vmem %s1, %s702
        %p704 = pneg %p93
        %p705 = pneg %p90
        %p706 = pneg %p114
        %p707 = pneg %p111
        %p708 = pneg %p135
        %p709 = pneg %p132
        %p710 = scmp.lt.s32.totalorder %s39, 1
        %s711 = scalar_select %p710, %s39, 1
        %s712 = smul.addr %s711, 48
        %s713 = smul.addr %s712, 4
        %s714 = scalar_lea.vmem %s4, %s713
        %p715 = pneg %p161
        %p716 = pneg %p158
        %p717 = scmp.lt.s32.totalorder %s39, 1
        %s718 = scalar_select %p717, %s39, 1
        %s719 = smul.addr %s718, 12
        %s720 = scalar_lea.vmem %s5, %s719
        %p721 = pneg %p187
        %p722 = pneg %p184
        %p723 = scmp.lt.s32.totalorder %s39, 1
        %s724 = scalar_select %p723, %s39, 1
        %s725 = smul.addr %s724, 4
        %s726 = smul.addr %s725, 4
        %s727 = scalar_lea.vmem %s6, %s726
        %p728 = pneg %p213
        %p729 = pneg %p210
        %p730 = scmp.lt.s32.totalorder %s39, 1
        %s731 = scalar_select %p730, %s39, 1
        %s732 = scalar_lea.vmem %s7, %s731
        %p733 = pneg %p239
        %p734 = pneg %p236
        %p735 = scmp.lt.s32.totalorder %s39, 1
        %s736 = scalar_select %p735, %s39, 1
        %s737 = scalar_lea.vmem %s8, %s736
        %p738 = pneg %p265
        %p739 = pneg %p262
        %p740 = scmp.lt.s32.totalorder %s39, 1
        %s741 = scalar_select %p740, %s39, 1
        %s742 = scalar_lea.vmem %s9, %s741
        %p743 = pneg %p291
        %p744 = pneg %p288
        %p745 = scmp.lt.s32.totalorder %s39, 1
        %s746 = scalar_select %p745, %s39, 1
        %s747 = smul.addr %s746, 4
        %s748 = smul.addr %s747, 4
        %s749 = scalar_lea.vmem %s10, %s748
        %p750 = pneg %p317
        %p751 = pneg %p314
        %p752 = scmp.lt.s32.totalorder %s39, 1
        %s753 = scalar_select %p752, %s39, 1
        %s754 = scalar_lea.vmem %s11, %s753
        %p755 = pneg %p343
        %p756 = pneg %p340
        %p757 = scmp.lt.s32.totalorder %s39, 1
        %s758 = scalar_select %p757, %s39, 1
        %s759 = smul.addr %s758, 16
        %s760 = smul.addr %s759, 4
        %s761 = scalar_lea.vmem %s12, %s760
        %p762 = pneg %p369
        %p763 = pneg %p366
        %p764 = scmp.lt.s32.totalorder %s39, 1
        %s765 = scalar_select %p764, %s39, 1
        %s766 = scalar_lea.vmem %s13, %s765
        %p767 = pneg %p395
        %p768 = pneg %p392
        %p769 = scmp.lt.s32.totalorder %s39, 1
        %s770 = scalar_select %p769, %s39, 1
        %s771 = scalar_lea.vmem %s14, %s770
        %p772 = pneg %p421
        %p773 = pneg %p418
        %p774 = scmp.lt.s32.totalorder %s39, 1
        %s775 = scalar_select %p774, %s39, 1
        %s776 = scalar_lea.vmem %s15, %s775
        %p777 = pneg %p447
        %p778 = pneg %p444
        %p779 = pneg %p468
        %p780 = pneg %p465
        %p781 = pneg %p489
        %p782 = pneg %p486
        %p783 = pneg %p510
        %p784 = pneg %p507
        %p785 = pneg %p531
        %p786 = pneg %p528
        %p787 = pneg %p557
        %p788 = pneg %p554
        %s789 = sand.u32 %s544, 1
        %s790 = scalar_lea.sflag [#allocation4], %s789
        %s791 = sand.u32 %s544, 1
        %s792 = scalar_lea.vmem [#allocation3], %s791
        %p793 = scmp.lt.s32.totalorder %s38, 1
        %s794 = scalar_select %p793, %s38, 1
        %s795 = smul.addr %s794, 8
        %s796 = scalar_lea.vmem %s0, %s795
        %p797 = scmp.lt.s32.totalorder %s38, 1
        %s798 = scalar_select %p797, %s38, 1
        %s799 = scalar_lea.vmem %s1, %s798
        %p800 = scmp.lt.s32.totalorder %s39, 1
        %s801 = scalar_select %p800, %s39, 1
        %s802 = smul.addr %s801, 48
        %s803 = smul.addr %s802, 4
        %s804 = scalar_lea.vmem %s4, %s803
        %p805 = scmp.lt.s32.totalorder %s39, 1
        %s806 = scalar_select %p805, %s39, 1
        %s807 = smul.addr %s806, 12
        %s808 = scalar_lea.vmem %s5, %s807
        %p809 = scmp.lt.s32.totalorder %s39, 1
        %s810 = scalar_select %p809, %s39, 1
        %s811 = smul.addr %s810, 4
        %s812 = smul.addr %s811, 4
        %s813 = scalar_lea.vmem %s6, %s812
        %p814 = scmp.lt.s32.totalorder %s39, 1
        %s815 = scalar_select %p814, %s39, 1
        %s816 = scalar_lea.vmem %s7, %s815
        %p817 = scmp.lt.s32.totalorder %s39, 1
        %s818 = scalar_select %p817, %s39, 1
        %s819 = scalar_lea.vmem %s8, %s818
        %p820 = scmp.lt.s32.totalorder %s39, 1
        %s821 = scalar_select %p820, %s39, 1
        %s822 = scalar_lea.vmem %s9, %s821
        %p823 = scmp.lt.s32.totalorder %s39, 1
        %s824 = scalar_select %p823, %s39, 1
        %s825 = smul.addr %s824, 4
        %s826 = smul.addr %s825, 4
        %s827 = scalar_lea.vmem %s10, %s826
        %p828 = scmp.lt.s32.totalorder %s39, 1
        %s829 = scalar_select %p828, %s39, 1
        %s830 = scalar_lea.vmem %s11, %s829
        %p831 = scmp.lt.s32.totalorder %s39, 1
        %s832 = scalar_select %p831, %s39, 1
        %s833 = smul.addr %s832, 16
        %s834 = smul.addr %s833, 4
        %s835 = scalar_lea.vmem %s12, %s834
        %p836 = scmp.lt.s32.totalorder %s39, 1
        %s837 = scalar_select %p836, %s39, 1
        %s838 = scalar_lea.vmem %s13, %s837
        %p839 = scmp.lt.s32.totalorder %s39, 1
        %s840 = scalar_select %p839, %s39, 1
        %s841 = scalar_lea.vmem %s14, %s840
        %p842 = scmp.lt.s32.totalorder %s39, 1
        %s843 = scalar_select %p842, %s39, 1
        %s844 = scalar_lea.vmem %s15, %s843
        %p846 = scmp.eq.s32.totalorder %s39, 0
        // Predicated region
        $region101: #{tpu_custom_call.1} parent=99 // pred_check
          %p847 = pneg %p846
        $region102: #{tpu_custom_call.1} parent=99 // pred_check_branch
          %849 = sbr.rel (%p847) target = $region104
        $region103: #{tpu_custom_call.1} parent=99 // pred_region
          %v850 = vld [vmem:[%s796] sm:$0xff]
          %v851 = vld [vmem:[%s2] sm:$0x1]
          %v852 = vld [vmem:[%s3] sm:$0x1]
          %vm853 = vcmask 261120
          %v854 = vsel %vm853, %v850, 0.0
          %855 = vadd.xlane.f32.xlu0 %v854
          %v856 = vpop.xlane.xlu0 %855
          %v857 = vrcp.pop 32.0
          %v858 = vmul.f32 32.0, %v857
          %v859 = vsub.f32 1.0, %v858
          %v860 = vmul.f32 %v857, %v859
          %v861 = vadd.f32 %v857, %v860
          %vm862 = vweird.f32 %v857
          %v863 = vsel %vm862, %v857, %v861
          %v864 = vmul.f32 %v856, %v863
          %v865 = vsub.f32 %v850, %v864
          %v866 = vmul.f32 %v865, %v865
          %v867 = vsel %vm853, %v866, 0.0
          %868 = vadd.xlane.f32.xlu0 %v867
          %v869 = vpop.xlane.xlu0 %868
          %v870 = vmul.f32 %v869, %v863
          %v871 = vadd.f32 %v870, 1e-12
          %v872 = vrsqrt.pop %v871
          %v873 = vmul.f32 %v872, %v871
          %v874 = vmul.f32 %v873, %v872
          %v875 = vmul.f32 0.5, %v874
          %v876 = vsub.f32 1.5, %v875
          %v877 = vmul.f32 %v872, %v876
          %vm878 = vweird.f32 %v871
          %vm879 = vweird.f32 %v872
          %vm880 = vmor %vm878, %vm879
          %v881 = vsel %vm880, %v872, %v877
          %v882 = vmul.f32 %v865, %v881
          %v884 = vperm.slane %v851, 0
          %v886 = vmul.f32 %v882, %v884
          %v888 = vperm.slane %v852, 0
          %v890 = vadd.f32 %v886, %v888
          %891 = vst.msk [vmem:[#allocation2] sm:$0xff] %vm853, %v890
        $region104: #{tpu_custom_call.1} parent=99 // pred_fallthru
          _
        %v892 = vld [vmem:[#allocation2] sm:$0xff]
        %v893 = vld [vmem:[%s799] sm:$0x1]
        %v895 = vperm.slane %v893, 0
        %v897 = vpack.c.bf16 %v892, %v892
        %v898 = vld [vmem:[%s804] sm:$0xf]
        %v899 = vld [vmem:[%s804 + $0x4] sm:$0xf]
        %v900 = vld [vmem:[%s804 + $0x8] sm:$0xf]
        %v901 = vld [vmem:[%s804 + $0xc] sm:$0xf]
        %v902 = vld [vmem:[%s804 + $0x10] sm:$0xf]
        %v903 = vld [vmem:[%s804 + $0x14] sm:$0xf]
        %v904 = vld [vmem:[%s804 + $0x18] sm:$0xf]
        %v905 = vld [vmem:[%s804 + $0x1c] sm:$0xf]
        %v906 = vld [vmem:[%s804 + $0x20] sm:$0xf]
        %v907 = vld [vmem:[%s804 + $0x24] sm:$0xf]
        %v908 = vld [vmem:[%s804 + $0x28] sm:$0xf]
        %v909 = vld [vmem:[%s804 + $0x2c] sm:$0xf]
        %v910 = vld [vmem:[%s804 + $0x30] sm:$0xf]
        %v911 = vld [vmem:[%s804 + $0x34] sm:$0xf]
        %v912 = vld [vmem:[%s804 + $0x38] sm:$0xf]
        %v913 = vld [vmem:[%s804 + $0x3c] sm:$0xf]
        %v914 = vld [vmem:[%s804 + $0x40] sm:$0xf]
        %v915 = vld [vmem:[%s804 + $0x44] sm:$0xf]
        %v916 = vld [vmem:[%s804 + $0x48] sm:$0xf]
        %v917 = vld [vmem:[%s804 + $0x4c] sm:$0xf]
        %v918 = vld [vmem:[%s804 + $0x50] sm:$0xf]
        %v919 = vld [vmem:[%s804 + $0x54] sm:$0xf]
        %v920 = vld [vmem:[%s804 + $0x58] sm:$0xf]
        %v921 = vld [vmem:[%s804 + $0x5c] sm:$0xf]
        %v922 = vld [vmem:[%s804 + $0x60] sm:$0xf]
        %v923 = vld [vmem:[%s804 + $0x64] sm:$0xf]
        %v924 = vld [vmem:[%s804 + $0x68] sm:$0xf]
        %v925 = vld [vmem:[%s804 + $0x6c] sm:$0xf]
        %v926 = vld [vmem:[%s804 + $0x70] sm:$0xf]
        %v927 = vld [vmem:[%s804 + $0x74] sm:$0xf]
        %v928 = vld [vmem:[%s804 + $0x78] sm:$0xf]
        %v929 = vld [vmem:[%s804 + $0x7c] sm:$0xf]
        %v930 = vld [vmem:[%s804 + $0x80] sm:$0xf]
        %v931 = vld [vmem:[%s804 + $0x84] sm:$0xf]
        %v932 = vld [vmem:[%s804 + $0x88] sm:$0xf]
        %v933 = vld [vmem:[%s804 + $0x8c] sm:$0xf]
        %v934 = vld [vmem:[%s804 + $0x90] sm:$0xf]
        %v935 = vld [vmem:[%s804 + $0x94] sm:$0xf]
        %v936 = vld [vmem:[%s804 + $0x98] sm:$0xf]
        %v937 = vld [vmem:[%s804 + $0x9c] sm:$0xf]
        %v938 = vld [vmem:[%s804 + $0xa0] sm:$0xf]
        %v939 = vld [vmem:[%s804 + $0xa4] sm:$0xf]
        %v940 = vld [vmem:[%s804 + $0xa8] sm:$0xf]
        %v941 = vld [vmem:[%s804 + $0xac] sm:$0xf]
        %v942 = vld [vmem:[%s804 + $0xb0] sm:$0xf]
        %v943 = vld [vmem:[%s804 + $0xb4] sm:$0xf]
        %v944 = vld [vmem:[%s804 + $0xb8] sm:$0xf]
        %v945 = vld [vmem:[%s804 + $0xbc] sm:$0xf]
        %v946 = vld [vmem:[%s808] sm:$0x1]
        %v947 = vld [vmem:[%s808 + $0x1] sm:$0x1]
        %v948 = vld [vmem:[%s808 + $0x2] sm:$0x1]
        %v949 = vld [vmem:[%s808 + $0x3] sm:$0x1]
        %v950 = vld [vmem:[%s808 + $0x4] sm:$0x1]
        %v951 = vld [vmem:[%s808 + $0x5] sm:$0x1]
        %v952 = vld [vmem:[%s808 + $0x6] sm:$0x1]
        %v953 = vld [vmem:[%s808 + $0x7] sm:$0x1]
        %v954 = vld [vmem:[%s808 + $0x8] sm:$0x1]
        %v955 = vld [vmem:[%s808 + $0x9] sm:$0x1]
        %v956 = vld [vmem:[%s808 + $0xa] sm:$0x1]
        %v957 = vld [vmem:[%s808 + $0xb] sm:$0x1]
        %v970 = vperm.slane %v946, 0
        %v971 = vperm.slane %v947, 0
        %v972 = vperm.slane %v948, 0
        %v973 = vperm.slane %v949, 0
        %v974 = vperm.slane %v950, 0
        %v975 = vperm.slane %v951, 0
        %v976 = vperm.slane %v952, 0
        %v977 = vperm.slane %v953, 0
        %v978 = vperm.slane %v954, 0
        %v979 = vperm.slane %v955, 0
        %v980 = vperm.slane %v956, 0
        %v981 = vperm.slane %v957, 0
        %v998 = vunpack.c.l.b16 %v898
        %v999 = vunpack.c.l.b16 %v899
        %v1000 = vunpack.c.l.b16 %v900
        %v1001 = vunpack.c.l.b16 %v901
        %v1002 = vpack.c.b16 %v999, %v998
        %v1003 = vpack.c.b16 %v1001, %v1000
        %vm1006 = vcmask 261120
        %v1008 = vsel %vm1006, %v897, 0
        %1010 = vmatpush.bf16.msra.mxu0 0
        %1011 = vmatpush.bf16.msra.mxu0 0
        %1012 = vmatpush.bf16.msra.mxu0 0
        %1013 = vmatpush.bf16.msra.mxu0 0
        %1014 = vmatpush.bf16.msra.mxu0 0
        %1015 = vmatpush.bf16.msra.mxu0 0
        %1016 = vmatpush.bf16.msra.mxu0 %v1003
        %1017 = vmatpush.bf16.msra.mxu0 %v1002
        %1018 = vmatmul.bf16.gmra.mxu0 %v1008
        %v1019 = vpop.f32.mrf.mxu0
        %v1020 = vadd.f32 %v970, %v1019
        %v1021 = vpop.f32.mrf.mxu0
        %1022 = vdwg.mxu0
        %v1027 = vunpack.c.l.b16 %v902
        %v1028 = vunpack.c.l.b16 %v903
        %v1029 = vunpack.c.l.b16 %v904
        %v1030 = vunpack.c.l.b16 %v905
        %v1031 = vpack.c.b16 %v1028, %v1027
        %v1032 = vpack.c.b16 %v1030, %v1029
        %1035 = vmatpush.bf16.msra.mxu0 0
        %1036 = vmatpush.bf16.msra.mxu0 0
        %1037 = vmatpush.bf16.msra.mxu0 0
        %1038 = vmatpush.bf16.msra.mxu0 0
        %1039 = vmatpush.bf16.msra.mxu0 0
        %1040 = vmatpush.bf16.msra.mxu0 0
        %1041 = vmatpush.bf16.msra.mxu0 %v1032
        %1042 = vmatpush.bf16.msra.mxu0 %v1031
        %1043 = vmatmul.bf16.gmra.mxu0 %v1008
        %v1044 = vpop.f32.mrf.mxu0
        %v1045 = vadd.f32 %v971, %v1044
        %v1046 = vpop.f32.mrf.mxu0
        %1047 = vdwg.mxu0
        %v1052 = vunpack.c.l.b16 %v906
        %v1053 = vunpack.c.l.b16 %v907
        %v1054 = vunpack.c.l.b16 %v908
        %v1055 = vunpack.c.l.b16 %v909
        %v1056 = vpack.c.b16 %v1053, %v1052
        %v1057 = vpack.c.b16 %v1055, %v1054
        %1060 = vmatpush.bf16.msra.mxu0 0
        %1061 = vmatpush.bf16.msra.mxu0 0
        %1062 = vmatpush.bf16.msra.mxu0 0
        %1063 = vmatpush.bf16.msra.mxu0 0
        %1064 = vmatpush.bf16.msra.mxu0 0
        %1065 = vmatpush.bf16.msra.mxu0 0
        %1066 = vmatpush.bf16.msra.mxu0 %v1057
        %1067 = vmatpush.bf16.msra.mxu0 %v1056
        %1068 = vmatmul.bf16.gmra.mxu0 %v1008
        %v1069 = vpop.f32.mrf.mxu0
        %v1070 = vadd.f32 %v972, %v1069
        %v1071 = vpop.f32.mrf.mxu0
        %1072 = vdwg.mxu0
        %v1077 = vunpack.c.l.b16 %v910
        %v1078 = vunpack.c.l.b16 %v911
        %v1079 = vunpack.c.l.b16 %v912
        %v1080 = vunpack.c.l.b16 %v913
        %v1081 = vpack.c.b16 %v1078, %v1077
        %v1082 = vpack.c.b16 %v1080, %v1079
        %1085 = vmatpush.bf16.msra.mxu0 0
        %1086 = vmatpush.bf16.msra.mxu0 0
        %1087 = vmatpush.bf16.msra.mxu0 0
        %1088 = vmatpush.bf16.msra.mxu0 0
        %1089 = vmatpush.bf16.msra.mxu0 0
        %1090 = vmatpush.bf16.msra.mxu0 0
        %1091 = vmatpush.bf16.msra.mxu0 %v1082
        %1092 = vmatpush.bf16.msra.mxu0 %v1081
        %1093 = vmatmul.bf16.gmra.mxu0 %v1008
        %v1094 = vpop.f32.mrf.mxu0
        %v1095 = vadd.f32 %v973, %v1094
        %v1096 = vpop.f32.mrf.mxu0
        %1097 = vdwg.mxu0
        %v1102 = vunpack.c.l.b16 %v914
        %v1103 = vunpack.c.l.b16 %v915
        %v1104 = vunpack.c.l.b16 %v916
        %v1105 = vunpack.c.l.b16 %v917
        %v1106 = vpack.c.b16 %v1103, %v1102
        %v1107 = vpack.c.b16 %v1105, %v1104
        %1110 = vmatpush.bf16.msra.mxu0 0
        %1111 = vmatpush.bf16.msra.mxu0 0
        %1112 = vmatpush.bf16.msra.mxu0 0
        %1113 = vmatpush.bf16.msra.mxu0 0
        %1114 = vmatpush.bf16.msra.mxu0 0
        %1115 = vmatpush.bf16.msra.mxu0 0
        %1116 = vmatpush.bf16.msra.mxu0 %v1107
        %1117 = vmatpush.bf16.msra.mxu0 %v1106
        %1118 = vmatmul.bf16.gmra.mxu0 %v1008
        %v1119 = vpop.f32.mrf.mxu0
        %v1120 = vadd.f32 %v974, %v1119
        %v1121 = vpop.f32.mrf.mxu0
        %1122 = vdwg.mxu0
        %v1127 = vunpack.c.l.b16 %v918
        %v1128 = vunpack.c.l.b16 %v919
        %v1129 = vunpack.c.l.b16 %v920
        %v1130 = vunpack.c.l.b16 %v921
        %v1131 = vpack.c.b16 %v1128, %v1127
        %v1132 = vpack.c.b16 %v1130, %v1129
        %1135 = vmatpush.bf16.msra.mxu0 0
        %1136 = vmatpush.bf16.msra.mxu0 0
        %1137 = vmatpush.bf16.msra.mxu0 0
        %1138 = vmatpush.bf16.msra.mxu0 0
        %1139 = vmatpush.bf16.msra.mxu0 0
        %1140 = vmatpush.bf16.msra.mxu0 0
        %1141 = vmatpush.bf16.msra.mxu0 %v1132
        %1142 = vmatpush.bf16.msra.mxu0 %v1131
        %1143 = vmatmul.bf16.gmra.mxu0 %v1008
        %v1144 = vpop.f32.mrf.mxu0
        %v1145 = vadd.f32 %v975, %v1144
        %v1146 = vpop.f32.mrf.mxu0
        %1147 = vdwg.mxu0
        %v1152 = vunpack.c.l.b16 %v922
        %v1153 = vunpack.c.l.b16 %v923
        %v1154 = vunpack.c.l.b16 %v924
        %v1155 = vunpack.c.l.b16 %v925
        %v1156 = vpack.c.b16 %v1153, %v1152
        %v1157 = vpack.c.b16 %v1155, %v1154
        %1160 = vmatpush.bf16.msra.mxu0 0
        %1161 = vmatpush.bf16.msra.mxu0 0
        %1162 = vmatpush.bf16.msra.mxu0 0
        %1163 = vmatpush.bf16.msra.mxu0 0
        %1164 = vmatpush.bf16.msra.mxu0 0
        %1165 = vmatpush.bf16.msra.mxu0 0
        %1166 = vmatpush.bf16.msra.mxu0 %v1157
        %1167 = vmatpush.bf16.msra.mxu0 %v1156
        %1168 = vmatmul.bf16.gmra.mxu0 %v1008
        %v1169 = vpop.f32.mrf.mxu0
        %v1170 = vadd.f32 %v976, %v1169
        %v1171 = vpop.f32.mrf.mxu0
        %1172 = vdwg.mxu0
        %v1177 = vunpack.c.l.b16 %v926
        %v1178 = vunpack.c.l.b16 %v927
        %v1179 = vunpack.c.l.b16 %v928
        %v1180 = vunpack.c.l.b16 %v929
        %v1181 = vpack.c.b16 %v1178, %v1177
        %v1182 = vpack.c.b16 %v1180, %v1179
        %1185 = vmatpush.bf16.msra.mxu0 0
        %1186 = vmatpush.bf16.msra.mxu0 0
        %1187 = vmatpush.bf16.msra.mxu0 0
        %1188 = vmatpush.bf16.msra.mxu0 0
        %1189 = vmatpush.bf16.msra.mxu0 0
        %1190 = vmatpush.bf16.msra.mxu0 0
        %1191 = vmatpush.bf16.msra.mxu0 %v1182
        %1192 = vmatpush.bf16.msra.mxu0 %v1181
        %1193 = vmatmul.bf16.gmra.mxu0 %v1008
        %v1194 = vpop.f32.mrf.mxu0
        %v1195 = vadd.f32 %v977, %v1194
        %v1196 = vpop.f32.mrf.mxu0
        %1197 = vdwg.mxu0
        %v1202 = vunpack.c.l.b16 %v930
        %v1203 = vunpack.c.l.b16 %v931
        %v1204 = vunpack.c.l.b16 %v932
        %v1205 = vunpack.c.l.b16 %v933
        %v1206 = vpack.c.b16 %v1203, %v1202
        %v1207 = vpack.c.b16 %v1205, %v1204
        %1210 = vmatpush.bf16.msra.mxu0 0
        %1211 = vmatpush.bf16.msra.mxu0 0
        %1212 = vmatpush.bf16.msra.mxu0 0
        %1213 = vmatpush.bf16.msra.mxu0 0
        %1214 = vmatpush.bf16.msra.mxu0 0
        %1215 = vmatpush.bf16.msra.mxu0 0
        %1216 = vmatpush.bf16.msra.mxu0 %v1207
        %1217 = vmatpush.bf16.msra.mxu0 %v1206
        %1218 = vmatmul.bf16.gmra.mxu0 %v1008
        %v1219 = vpop.f32.mrf.mxu0
        %v1220 = vadd.f32 %v978, %v1219
        %v1221 = vpop.f32.mrf.mxu0
        %1222 = vdwg.mxu0
        %v1227 = vunpack.c.l.b16 %v934
        %v1228 = vunpack.c.l.b16 %v935
        %v1229 = vunpack.c.l.b16 %v936
        %v1230 = vunpack.c.l.b16 %v937
        %v1231 = vpack.c.b16 %v1228, %v1227
        %v1232 = vpack.c.b16 %v1230, %v1229
        %1235 = vmatpush.bf16.msra.mxu0 0
        %1236 = vmatpush.bf16.msra.mxu0 0
        %1237 = vmatpush.bf16.msra.mxu0 0
        %1238 = vmatpush.bf16.msra.mxu0 0
        %1239 = vmatpush.bf16.msra.mxu0 0
        %1240 = vmatpush.bf16.msra.mxu0 0
        %1241 = vmatpush.bf16.msra.mxu0 %v1232
        %1242 = vmatpush.bf16.msra.mxu0 %v1231
        %1243 = vmatmul.bf16.gmra.mxu0 %v1008
        %v1244 = vpop.f32.mrf.mxu0
        %v1245 = vadd.f32 %v979, %v1244
        %v1246 = vpop.f32.mrf.mxu0
        %1247 = vdwg.mxu0
        %v1252 = vunpack.c.l.b16 %v938
        %v1253 = vunpack.c.l.b16 %v939
        %v1254 = vunpack.c.l.b16 %v940
        %v1255 = vunpack.c.l.b16 %v941
        %v1256 = vpack.c.b16 %v1253, %v1252
        %v1257 = vpack.c.b16 %v1255, %v1254
        %1260 = vmatpush.bf16.msra.mxu0 0
        %1261 = vmatpush.bf16.msra.mxu0 0
        %1262 = vmatpush.bf16.msra.mxu0 0
        %1263 = vmatpush.bf16.msra.mxu0 0
        %1264 = vmatpush.bf16.msra.mxu0 0
        %1265 = vmatpush.bf16.msra.mxu0 0
        %1266 = vmatpush.bf16.msra.mxu0 %v1257
        %1267 = vmatpush.bf16.msra.mxu0 %v1256
        %1268 = vmatmul.bf16.gmra.mxu0 %v1008
        %v1269 = vpop.f32.mrf.mxu0
        %v1270 = vadd.f32 %v980, %v1269
        %v1271 = vpop.f32.mrf.mxu0
        %1272 = vdwg.mxu0
        %v1277 = vunpack.c.l.b16 %v942
        %v1278 = vunpack.c.l.b16 %v943
        %v1279 = vunpack.c.l.b16 %v944
        %v1280 = vunpack.c.l.b16 %v945
        %v1281 = vpack.c.b16 %v1278, %v1277
        %v1282 = vpack.c.b16 %v1280, %v1279
        %1285 = vmatpush.bf16.msra.mxu0 0
        %1286 = vmatpush.bf16.msra.mxu0 0
        %1287 = vmatpush.bf16.msra.mxu0 0
        %1288 = vmatpush.bf16.msra.mxu0 0
        %1289 = vmatpush.bf16.msra.mxu0 0
        %1290 = vmatpush.bf16.msra.mxu0 0
        %1291 = vmatpush.bf16.msra.mxu0 %v1282
        %1292 = vmatpush.bf16.msra.mxu0 %v1281
        %1293 = vmatmul.bf16.gmra.mxu0 %v1008
        %v1294 = vpop.f32.mrf.mxu0
        %v1295 = vadd.f32 %v981, %v1294
        %v1296 = vpop.f32.mrf.mxu0
        %1297 = vdwg.mxu0
        %v1298 = vpack.c.bf16 %v1020, %v1020
        %v1299 = vpack.c.bf16 %v1045, %v1045
        %v1300 = vpack.c.bf16 %v1070, %v1070
        %v1301 = vpack.c.bf16 %v1095, %v1095
        %v1302 = vpack.c.bf16 %v1120, %v1120
        %v1303 = vpack.c.bf16 %v1145, %v1145
        %v1304 = vpack.c.bf16 %v1170, %v1170
        %v1305 = vpack.c.bf16 %v1195, %v1195
        %v1306 = vpack.c.bf16 %v1220, %v1220
        %v1307 = vpack.c.bf16 %v1245, %v1245
        %v1308 = vpack.c.bf16 %v1270, %v1270
        %v1309 = vpack.c.bf16 %v1295, %v1295
        %vm1310 = vcmask 64512
        %v1312 = vsel %vm1310, %v1298, 0
        %v1315 = vsel %vm1310, %v1302, 0
        %1317 = vmatpush.bf16.xpose.msra.mxu0 0
        %1318 = vmatpush.bf16.xpose.msra.mxu0 0
        %1319 = vmatpush.bf16.xpose.msra.mxu0 0
        %1320 = vmatpush.bf16.xpose.msra.mxu0 0
        %1321 = vmatpush.bf16.xpose.msra.mxu0 0
        %1322 = vmatpush.bf16.xpose.msra.mxu0 0
        %1323 = vmatpush.bf16.xpose.msra.mxu0 0
        %1324 = vmatpush.bf16.xpose.msra.mxu0 %v1315
        %1325 = vmatmul.bf16.gmra.mxu0 %v1312
        %v1326 = vpop.f32.mrf.mxu0
        %v1327 = vadd.f32 %v895, %v1326
        %v1328 = vpop.f32.mrf.mxu0
        %1329 = vdwg.mxu0
        %v1331 = vsel %vm1310, %v1299, 0
        %v1334 = vsel %vm1310, %v1303, 0
        %1336 = vmatpush.bf16.xpose.msra.mxu0 0
        %1337 = vmatpush.bf16.xpose.msra.mxu0 0
        %1338 = vmatpush.bf16.xpose.msra.mxu0 0
        %1339 = vmatpush.bf16.xpose.msra.mxu0 0
        %1340 = vmatpush.bf16.xpose.msra.mxu0 0
        %1341 = vmatpush.bf16.xpose.msra.mxu0 0
        %1342 = vmatpush.bf16.xpose.msra.mxu0 0
        %1343 = vmatpush.bf16.xpose.msra.mxu0 %v1334
        %1344 = vmatmul.bf16.gmra.mxu0 %v1331
        %v1345 = vpop.f32.mrf.mxu0
        %v1346 = vadd.f32 %v895, %v1345
        %v1347 = vpop.f32.mrf.mxu0
        %1348 = vdwg.mxu0
        %v1350 = vsel %vm1310, %v1300, 0
        %v1353 = vsel %vm1310, %v1304, 0
        %1355 = vmatpush.bf16.xpose.msra.mxu0 0
        %1356 = vmatpush.bf16.xpose.msra.mxu0 0
        %1357 = vmatpush.bf16.xpose.msra.mxu0 0
        %1358 = vmatpush.bf16.xpose.msra.mxu0 0
        %1359 = vmatpush.bf16.xpose.msra.mxu0 0
        %1360 = vmatpush.bf16.xpose.msra.mxu0 0
        %1361 = vmatpush.bf16.xpose.msra.mxu0 0
        %1362 = vmatpush.bf16.xpose.msra.mxu0 %v1353
        %1363 = vmatmul.bf16.gmra.mxu0 %v1350
        %v1364 = vpop.f32.mrf.mxu0
        %v1365 = vadd.f32 %v895, %v1364
        %v1366 = vpop.f32.mrf.mxu0
        %1367 = vdwg.mxu0
        %v1369 = vsel %vm1310, %v1301, 0
        %v1372 = vsel %vm1310, %v1305, 0
        %1374 = vmatpush.bf16.xpose.msra.mxu0 0
        %1375 = vmatpush.bf16.xpose.msra.mxu0 0
        %1376 = vmatpush.bf16.xpose.msra.mxu0 0
        %1377 = vmatpush.bf16.xpose.msra.mxu0 0
        %1378 = vmatpush.bf16.xpose.msra.mxu0 0
        %1379 = vmatpush.bf16.xpose.msra.mxu0 0
        %1380 = vmatpush.bf16.xpose.msra.mxu0 0
        %1381 = vmatpush.bf16.xpose.msra.mxu0 %v1372
        %1382 = vmatmul.bf16.gmra.mxu0 %v1369
        %v1383 = vpop.f32.mrf.mxu0
        %v1384 = vadd.f32 %v895, %v1383
        %v1385 = vpop.f32.mrf.mxu0
        %1386 = vdwg.mxu0
        %v1387 = vsel %vm1310, %v1327, -inf
        %1388 = vmax.xlane.f32.xlu0 %v1387
        %v1389 = vpop.xlane.xlu0 %1388
        %v1390 = vsel %vm1310, %v1346, -inf
        %1391 = vmax.xlane.f32.xlu0 %v1390
        %v1392 = vpop.xlane.xlu0 %1391
        %v1393 = vsel %vm1310, %v1365, -inf
        %1394 = vmax.xlane.f32.xlu0 %v1393
        %v1395 = vpop.xlane.xlu0 %1394
        %v1396 = vsel %vm1310, %v1384, -inf
        %1397 = vmax.xlane.f32.xlu0 %v1396
        %v1398 = vpop.xlane.xlu0 %1397
        %v1399 = vsub.f32 %v1327, %v1389
        %v1400 = vsub.f32 %v1346, %v1392
        %v1401 = vsub.f32 %v1365, %v1395
        %v1402 = vsub.f32 %v1384, %v1398
        %v1403 = vmul.f32 %v1399, 1.442695
        %v1404 = vpow.pop %v1403
        %v1405 = vmul.f32 %v1400, 1.442695
        %v1406 = vpow.pop %v1405
        %v1407 = vmul.f32 %v1401, 1.442695
        %v1408 = vpow.pop %v1407
        %v1409 = vmul.f32 %v1402, 1.442695
        %v1410 = vpow.pop %v1409
        %v1411 = vsel %vm1310, %v1404, 0.0
        %1412 = vadd.xlane.f32.xlu0 %v1411
        %v1413 = vpop.xlane.xlu0 %1412
        %v1414 = vsel %vm1310, %v1406, 0.0
        %1415 = vadd.xlane.f32.xlu0 %v1414
        %v1416 = vpop.xlane.xlu0 %1415
        %v1417 = vsel %vm1310, %v1408, 0.0
        %1418 = vadd.xlane.f32.xlu0 %v1417
        %v1419 = vpop.xlane.xlu0 %1418
        %v1420 = vsel %vm1310, %v1410, 0.0
        %1421 = vadd.xlane.f32.xlu0 %v1420
        %v1422 = vpop.xlane.xlu0 %1421
        %v1423 = vrcp.pop %v1413
        %v1424 = vrcp.pop %v1416
        %v1425 = vrcp.pop %v1419
        %v1426 = vrcp.pop %v1422
        %v1427 = vmul.f32 %v1404, %v1423
        %v1428 = vmul.f32 %v1406, %v1424
        %v1429 = vmul.f32 %v1408, %v1425
        %v1430 = vmul.f32 %v1410, %v1426
        %v1431 = vpack.c.bf16 %v1427, %v1427
        %v1432 = vpack.c.bf16 %v1428, %v1428
        %v1433 = vpack.c.bf16 %v1429, %v1429
        %v1434 = vpack.c.bf16 %v1430, %v1430
        %v1436 = vsel %vm1310, %v1431, 0
        %vm1438 = vcmask 1043456
        %v1440 = vsel %vm1438, %v1306, 0
        %1442 = vmatpush.bf16.msra.mxu0 0
        %1443 = vmatpush.bf16.msra.mxu0 0
        %1444 = vmatpush.bf16.msra.mxu0 0
        %1445 = vmatpush.bf16.msra.mxu0 0
        %1446 = vmatpush.bf16.msra.mxu0 0
        %1447 = vmatpush.bf16.msra.mxu0 0
        %1448 = vmatpush.bf16.msra.mxu0 0
        %1449 = vmatpush.bf16.msra.mxu0 %v1440
        %1450 = vmatmul.bf16.gmra.mxu0 %v1436
        %v1451 = vpop.f32.mrf.mxu0
        %v1452 = vadd.f32 0.0, %v1451
        %v1453 = vpop.f32.mrf.mxu0
        %1454 = vdwg.mxu0
        %v1456 = vsel %vm1310, %v1432, 0
        %v1459 = vsel %vm1438, %v1307, 0
        %1461 = vmatpush.bf16.msra.mxu0 0
        %1462 = vmatpush.bf16.msra.mxu0 0
        %1463 = vmatpush.bf16.msra.mxu0 0
        %1464 = vmatpush.bf16.msra.mxu0 0
        %1465 = vmatpush.bf16.msra.mxu0 0
        %1466 = vmatpush.bf16.msra.mxu0 0
        %1467 = vmatpush.bf16.msra.mxu0 0
        %1468 = vmatpush.bf16.msra.mxu0 %v1459
        %1469 = vmatmul.bf16.gmra.mxu0 %v1456
        %v1470 = vpop.f32.mrf.mxu0
        %v1471 = vadd.f32 0.0, %v1470
        %v1472 = vpop.f32.mrf.mxu0
        %1473 = vdwg.mxu0
        %v1475 = vsel %vm1310, %v1433, 0
        %v1478 = vsel %vm1438, %v1308, 0
        %1480 = vmatpush.bf16.msra.mxu0 0
        %1481 = vmatpush.bf16.msra.mxu0 0
        %1482 = vmatpush.bf16.msra.mxu0 0
        %1483 = vmatpush.bf16.msra.mxu0 0
        %1484 = vmatpush.bf16.msra.mxu0 0
        %1485 = vmatpush.bf16.msra.mxu0 0
        %1486 = vmatpush.bf16.msra.mxu0 0
        %1487 = vmatpush.bf16.msra.mxu0 %v1478
        %1488 = vmatmul.bf16.gmra.mxu0 %v1475
        %v1489 = vpop.f32.mrf.mxu0
        %v1490 = vadd.f32 0.0, %v1489
        %v1491 = vpop.f32.mrf.mxu0
        %1492 = vdwg.mxu0
        %v1494 = vsel %vm1310, %v1434, 0
        %v1497 = vsel %vm1438, %v1309, 0
        %1499 = vmatpush.bf16.msra.mxu0 0
        %1500 = vmatpush.bf16.msra.mxu0 0
        %1501 = vmatpush.bf16.msra.mxu0 0
        %1502 = vmatpush.bf16.msra.mxu0 0
        %1503 = vmatpush.bf16.msra.mxu0 0
        %1504 = vmatpush.bf16.msra.mxu0 0
        %1505 = vmatpush.bf16.msra.mxu0 0
        %1506 = vmatpush.bf16.msra.mxu0 %v1497
        %1507 = vmatmul.bf16.gmra.mxu0 %v1494
        %v1508 = vpop.f32.mrf.mxu0
        %v1509 = vadd.f32 0.0, %v1508
        %v1510 = vpop.f32.mrf.mxu0
        %1511 = vdwg.mxu0
        %v1512 = vpack.c.bf16 %v1452, %v1452
        %v1513 = vpack.c.bf16 %v1471, %v1471
        %v1514 = vpack.c.bf16 %v1490, %v1490
        %v1515 = vpack.c.bf16 %v1509, %v1509
        %v1516 = vld [vmem:[%s813] sm:$0xf]
        %v1517 = vld [vmem:[%s813 + $0x4] sm:$0xf]
        %v1518 = vld [vmem:[%s813 + $0x8] sm:$0xf]
        %v1519 = vld [vmem:[%s813 + $0xc] sm:$0xf]
        %v1521 = vsel %vm1310, %v1512, 0
        %v1524 = vsel %vm1438, %v1516, 0
        %1526 = vmatpush.bf16.msra.mxu0 0
        %1527 = vmatpush.bf16.msra.mxu0 0
        %1528 = vmatpush.bf16.msra.mxu0 0
        %1529 = vmatpush.bf16.msra.mxu0 0
        %1530 = vmatpush.bf16.msra.mxu0 0
        %1531 = vmatpush.bf16.msra.mxu0 0
        %1532 = vmatpush.bf16.msra.mxu0 0
        %1533 = vmatpush.bf16.msra.mxu0 %v1524
        %1534 = vmatmul.bf16.gmra.mxu0 %v1521
        %v1535 = vpop.f32.mrf.mxu0
        %v1536 = vadd.f32 0.0, %v1535
        %v1537 = vpop.f32.mrf.mxu0
        %1538 = vdwg.mxu0
        %v1540 = vsel %vm1310, %v1513, 0
        %v1543 = vsel %vm1438, %v1517, 0
        %1545 = vmatpush.bf16.msra.mxu0 0
        %1546 = vmatpush.bf16.msra.mxu0 0
        %1547 = vmatpush.bf16.msra.mxu0 0
        %1548 = vmatpush.bf16.msra.mxu0 0
        %1549 = vmatpush.bf16.msra.mxu0 0
        %1550 = vmatpush.bf16.msra.mxu0 0
        %1551 = vmatpush.bf16.msra.mxu0 0
        %1552 = vmatpush.bf16.msra.mxu0 %v1543
        %1553 = vmatmul.bf16.gmra.mxu0 %v1540
        %v1554 = vpop.f32.mrf.mxu0
        %v1555 = vadd.f32 0.0, %v1554
        %v1556 = vpop.f32.mrf.mxu0
        %1557 = vdwg.mxu0
        %v1559 = vsel %vm1310, %v1514, 0
        %v1562 = vsel %vm1438, %v1518, 0
        %1564 = vmatpush.bf16.msra.mxu0 0
        %1565 = vmatpush.bf16.msra.mxu0 0
        %1566 = vmatpush.bf16.msra.mxu0 0
        %1567 = vmatpush.bf16.msra.mxu0 0
        %1568 = vmatpush.bf16.msra.mxu0 0
        %1569 = vmatpush.bf16.msra.mxu0 0
        %1570 = vmatpush.bf16.msra.mxu0 0
        %1571 = vmatpush.bf16.msra.mxu0 %v1562
        %1572 = vmatmul.bf16.gmra.mxu0 %v1559
        %v1573 = vpop.f32.mrf.mxu0
        %v1574 = vadd.f32 0.0, %v1573
        %v1575 = vpop.f32.mrf.mxu0
        %1576 = vdwg.mxu0
        %v1578 = vsel %vm1310, %v1515, 0
        %v1581 = vsel %vm1438, %v1519, 0
        %1583 = vmatpush.bf16.msra.mxu0 0
        %1584 = vmatpush.bf16.msra.mxu0 0
        %1585 = vmatpush.bf16.msra.mxu0 0
        %1586 = vmatpush.bf16.msra.mxu0 0
        %1587 = vmatpush.bf16.msra.mxu0 0
        %1588 = vmatpush.bf16.msra.mxu0 0
        %1589 = vmatpush.bf16.msra.mxu0 0
        %1590 = vmatpush.bf16.msra.mxu0 %v1581
        %1591 = vmatmul.bf16.gmra.mxu0 %v1578
        %v1592 = vpop.f32.mrf.mxu0
        %v1593 = vadd.f32 0.0, %v1592
        %v1594 = vpop.f32.mrf.mxu0
        %1595 = vdwg.mxu0
        %v1596 = vsel %vm1006, %v1536, 0.0
        %v1597 = vsel %vm1006, %v1555, 0.0
        %v1598 = vadd.f32 %v1596, %v1597
        %v1599 = vsel %vm1006, %v1574, 0.0
        %v1600 = vadd.f32 %v1598, %v1599
        %v1601 = vsel %vm1006, %v1593, 0.0
        %v1602 = vadd.f32 %v1600, %v1601
        %v1603 = vld [vmem:[%s816] sm:$0x1]
        %v1605 = vperm.slane %v1603, 0
        %v1607 = vadd.f32 %v1602, %v1605
        %v1608 = vadd.f32 %v1607, %v892
        %v1609 = vld [vmem:[%s819] sm:$0x1]
        %v1610 = vld [vmem:[%s822] sm:$0x1]
        %v1611 = vsel %vm1006, %v1608, 0.0
        %1612 = vadd.xlane.f32.xlu0 %v1611
        %v1613 = vpop.xlane.xlu0 %1612
        %v1614 = vrcp.pop 32.0
        %v1615 = vmul.f32 32.0, %v1614
        %v1616 = vsub.f32 1.0, %v1615
        %v1617 = vmul.f32 %v1614, %v1616
        %v1618 = vadd.f32 %v1614, %v1617
        %vm1619 = vweird.f32 %v1614
        %v1620 = vsel %vm1619, %v1614, %v1618
        %v1621 = vmul.f32 %v1613, %v1620
        %v1622 = vsub.f32 %v1608, %v1621
        %v1623 = vmul.f32 %v1622, %v1622
        %v1624 = vsel %vm1006, %v1623, 0.0
        %1625 = vadd.xlane.f32.xlu0 %v1624
        %v1626 = vpop.xlane.xlu0 %1625
        %v1627 = vmul.f32 %v1626, %v1620
        %v1628 = vadd.f32 %v1627, 1e-12
        %v1629 = vrsqrt.pop %v1628
        %v1630 = vmul.f32 %v1629, %v1628
        %v1631 = vmul.f32 %v1630, %v1629
        %v1632 = vmul.f32 0.5, %v1631
        %v1633 = vsub.f32 1.5, %v1632
        %v1634 = vmul.f32 %v1629, %v1633
        %vm1635 = vweird.f32 %v1628
        %vm1636 = vweird.f32 %v1629
        %vm1637 = vmor %vm1635, %vm1636
        %v1638 = vsel %vm1637, %v1629, %v1634
        %v1639 = vmul.f32 %v1622, %v1638
        %v1641 = vperm.slane %v1609, 0
        %v1643 = vmul.f32 %v1639, %v1641
        %v1645 = vperm.slane %v1610, 0
        %v1647 = vadd.f32 %v1643, %v1645
        %v1648 = vpack.c.bf16 %v1647, %v1647
        %v1649 = vld [vmem:[%s827] sm:$0xf]
        %v1650 = vld [vmem:[%s827 + $0x4] sm:$0xf]
        %v1651 = vld [vmem:[%s827 + $0x8] sm:$0xf]
        %v1652 = vld [vmem:[%s827 + $0xc] sm:$0xf]
        %v1653 = vld [vmem:[%s830] sm:$0x1]
        %v1655 = vperm.slane %v1653, 0
        %v1661 = vunpack.c.l.b16 %v1649
        %v1662 = vunpack.c.l.b16 %v1650
        %v1663 = vunpack.c.l.b16 %v1651
        %v1664 = vunpack.c.l.b16 %v1652
        %v1665 = vpack.c.b16 %v1662, %v1661
        %v1666 = vpack.c.b16 %v1664, %v1663
        %v1670 = vsel %vm1006, %v1648, 0
        %1672 = vmatpush.bf16.msra.mxu0 0
        %1673 = vmatpush.bf16.msra.mxu0 0
        %1674 = vmatpush.bf16.msra.mxu0 0
        %1675 = vmatpush.bf16.msra.mxu0 0
        %1676 = vmatpush.bf16.msra.mxu0 0
        %1677 = vmatpush.bf16.msra.mxu0 0
        %1678 = vmatpush.bf16.msra.mxu0 %v1666
        %1679 = vmatpush.bf16.msra.mxu0 %v1665
        %1680 = vmatmul.bf16.gmra.mxu0 %v1670
        %v1681 = vpop.f32.mrf.mxu0
        %v1682 = vadd.f32 %v1655, %v1681
        %v1683 = vpop.f32.mrf.mxu0
        %1684 = vdwg.mxu0
        %v1685 = vmul.f32 %v1682, 0.5
        %v1686 = vmul.f32 %v1682, 0.044715
        %v1687 = vmul.f32 %v1686, %v1682
        %v1688 = vmul.f32 %v1687, %v1682
        %v1689 = vadd.f32 %v1682, %v1688
        %v1690 = vmul.f32 %v1689, 0.7978846
        %v1691 = vtanh.pop %v1690
        %v1692 = vadd.f32 %v1691, 1.0
        %v1693 = vmul.f32 %v1685, %v1692
        %v1694 = vpack.c.bf16 %v1693, %v1693
        %v1695 = vld [vmem:[%s835] sm:$0xf]
        %v1696 = vld [vmem:[%s835 + $0x4] sm:$0xf]
        %v1697 = vld [vmem:[%s835 + $0x8] sm:$0xf]
        %v1698 = vld [vmem:[%s835 + $0xc] sm:$0xf]
        %v1699 = vld [vmem:[%s835 + $0x10] sm:$0xf]
        %v1700 = vld [vmem:[%s835 + $0x14] sm:$0xf]
        %v1701 = vld [vmem:[%s835 + $0x18] sm:$0xf]
        %v1702 = vld [vmem:[%s835 + $0x1c] sm:$0xf]
        %v1703 = vld [vmem:[%s835 + $0x20] sm:$0xf]
        %v1704 = vld [vmem:[%s835 + $0x24] sm:$0xf]
        %v1705 = vld [vmem:[%s835 + $0x28] sm:$0xf]
        %v1706 = vld [vmem:[%s835 + $0x2c] sm:$0xf]
        %v1707 = vld [vmem:[%s835 + $0x30] sm:$0xf]
        %v1708 = vld [vmem:[%s835 + $0x34] sm:$0xf]
        %v1709 = vld [vmem:[%s835 + $0x38] sm:$0xf]
        %v1710 = vld [vmem:[%s835 + $0x3c] sm:$0xf]
        %v1711 = vld [vmem:[%s838] sm:$0x1]
        %v1713 = vperm.slane %v1711, 0
        %v1731 = vunpack.c.l.b16 %v1695
        %v1732 = vunpack.c.l.b16 %v1696
        %v1733 = vunpack.c.l.b16 %v1697
        %v1734 = vunpack.c.l.b16 %v1698
        %v1735 = vunpack.c.l.b16 %v1699
        %v1736 = vunpack.c.l.b16 %v1700
        %v1737 = vunpack.c.l.b16 %v1701
        %v1738 = vunpack.c.l.b16 %v1702
        %v1739 = vunpack.c.l.b16 %v1703
        %v1740 = vunpack.c.l.b16 %v1704
        %v1741 = vunpack.c.l.b16 %v1705
        %v1742 = vunpack.c.l.b16 %v1706
        %v1743 = vunpack.c.l.b16 %v1707
        %v1744 = vunpack.c.l.b16 %v1708
        %v1745 = vunpack.c.l.b16 %v1709
        %v1746 = vunpack.c.l.b16 %v1710
        %v1747 = vpack.c.b16 %v1732, %v1731
        %v1748 = vpack.c.b16 %v1734, %v1733
        %v1749 = vpack.c.b16 %v1736, %v1735
        %v1750 = vpack.c.b16 %v1738, %v1737
        %v1751 = vpack.c.b16 %v1740, %v1739
        %v1752 = vpack.c.b16 %v1742, %v1741
        %v1753 = vpack.c.b16 %v1744, %v1743
        %v1754 = vpack.c.b16 %v1746, %v1745
        %1763 = vmatpush.bf16.msra.mxu0 %v1754
        %1764 = vmatpush.bf16.msra.mxu0 %v1753
        %1765 = vmatpush.bf16.msra.mxu0 %v1752
        %1766 = vmatpush.bf16.msra.mxu0 %v1751
        %1767 = vmatpush.bf16.msra.mxu0 %v1750
        %1768 = vmatpush.bf16.msra.mxu0 %v1749
        %1769 = vmatpush.bf16.msra.mxu0 %v1748
        %1770 = vmatpush.bf16.msra.mxu0 %v1747
        %1771 = vmatmul.bf16.gmra.mxu0 %v1694
        %v1772 = vpop.f32.mrf.mxu0
        %v1773 = vadd.f32 %v1713, %v1772
        %v1774 = vpop.f32.mrf.mxu0
        %1775 = vdwg.mxu0
        %v1776 = vadd.f32 %v1773, %v1647
        %v1777 = vld [vmem:[%s841] sm:$0x1]
        %v1778 = vld [vmem:[%s844] sm:$0x1]
        %v1779 = vsel %vm1006, %v1776, 0.0
        %1780 = vadd.xlane.f32.xlu0 %v1779
        %v1781 = vpop.xlane.xlu0 %1780
        %v1782 = vmul.f32 %v1781, %v1620
        %v1783 = vsub.f32 %v1776, %v1782
        %v1784 = vmul.f32 %v1783, %v1783
        %v1785 = vsel %vm1006, %v1784, 0.0
        %1786 = vadd.xlane.f32.xlu0 %v1785
        %v1787 = vpop.xlane.xlu0 %1786
        %v1788 = vmul.f32 %v1787, %v1620
        %v1789 = vadd.f32 %v1788, 1e-12
        %v1790 = vrsqrt.pop %v1789
        %v1791 = vmul.f32 %v1790, %v1789
        %v1792 = vmul.f32 %v1791, %v1790
        %v1793 = vmul.f32 0.5, %v1792
        %v1794 = vsub.f32 1.5, %v1793
        %v1795 = vmul.f32 %v1790, %v1794
        %vm1796 = vweird.f32 %v1789
        %vm1797 = vweird.f32 %v1790
        %vm1798 = vmor %vm1796, %vm1797
        %v1799 = vsel %vm1798, %v1790, %v1795
        %v1800 = vmul.f32 %v1783, %v1799
        %v1802 = vperm.slane %v1777, 0
        %v1804 = vmul.f32 %v1800, %v1802
        %v1806 = vperm.slane %v1778, 0
        %v1808 = vadd.f32 %v1804, %v1806
        %1809 = vst.msk [vmem:[#allocation2] sm:$0xff] %vm1006, %v1808
        %p1810 = scmp.eq.s32.totalorder %s39, 1
        // Predicated region
        $region105: #{tpu_custom_call.1} parent=99 // pred_check
          %p1811 = pneg %p1810
        $region106: #{tpu_custom_call.1} parent=99 // pred_check_branch
          %1813 = sbr.rel (%p1811) target = $region108
        $region107: #{tpu_custom_call.1} parent=99 // pred_region
          %v1814 = vpack.c.bf16 %v1808, %v1808
          %v1815 = vld [vmem:[%s16] sm:$0xf]
          %v1816 = vld [vmem:[%s16 + $0x4] sm:$0xf]
          %v1817 = vld [vmem:[%s16 + $0x8] sm:$0xf]
          %v1818 = vld [vmem:[%s16 + $0xc] sm:$0xf]
          %v1819 = vld [vmem:[%s17] sm:$0x1]
          %v1824 = vunpack.c.l.b16 %v1815
          %v1825 = vunpack.c.l.b16 %v1816
          %v1826 = vunpack.c.l.b16 %v1817
          %v1827 = vunpack.c.l.b16 %v1818
          %v1828 = vpack.c.b16 %v1825, %v1824
          %v1829 = vpack.c.b16 %v1827, %v1826
          %v1833 = vsel %vm1006, %v1814, 0
          %1835 = vmatpush.bf16.msra.mxu0 0
          %1836 = vmatpush.bf16.msra.mxu0 0
          %1837 = vmatpush.bf16.msra.mxu0 0
          %1838 = vmatpush.bf16.msra.mxu0 0
          %1839 = vmatpush.bf16.msra.mxu0 0
          %1840 = vmatpush.bf16.msra.mxu0 0
          %1841 = vmatpush.bf16.msra.mxu0 %v1829
          %1842 = vmatpush.bf16.msra.mxu0 %v1828
          %1843 = vmatmul.bf16.gmra.mxu0 %v1833
          %v1844 = vpop.f32.mrf.mxu0
          %v1845 = vadd.f32 %v1819, %v1844
          %v1846 = vpop.f32.mrf.mxu0
          %1847 = vdwg.mxu0
          %v1848 = vmax.f32 %v1845, 0.0
          %v1849 = vpack.c.bf16 %v1848, %v1848
          %v1850 = vld [vmem:[%s18] sm:$0xf]
          %v1851 = vld [vmem:[%s18 + $0x4] sm:$0xf]
          %v1852 = vld [vmem:[%s18 + $0x8] sm:$0xf]
          %v1853 = vld [vmem:[%s18 + $0xc] sm:$0xf]
          %v1854 = vld [vmem:[%s19] sm:$0x1]
          %v1859 = vunpack.c.l.b16 %v1850
          %v1860 = vunpack.c.l.b16 %v1851
          %v1861 = vunpack.c.l.b16 %v1852
          %v1862 = vunpack.c.l.b16 %v1853
          %v1863 = vpack.c.b16 %v1860, %v1859
          %v1864 = vpack.c.b16 %v1862, %v1861
          %v1868 = vsel %vm1006, %v1849, 0
          %1870 = vmatpush.bf16.msra.mxu0 0
          %1871 = vmatpush.bf16.msra.mxu0 0
          %1872 = vmatpush.bf16.msra.mxu0 0
          %1873 = vmatpush.bf16.msra.mxu0 0
          %1874 = vmatpush.bf16.msra.mxu0 0
          %1875 = vmatpush.bf16.msra.mxu0 0
          %1876 = vmatpush.bf16.msra.mxu0 %v1864
          %1877 = vmatpush.bf16.msra.mxu0 %v1863
          %1878 = vmatmul.bf16.gmra.mxu0 %v1868
          %v1879 = vpop.f32.mrf.mxu0
          %v1880 = vadd.f32 %v1854, %v1879
          %v1881 = vpop.f32.mrf.mxu0
          %1882 = vdwg.mxu0
          %vm1883 = vcmask 49152
          %1884 = vst.msk [vmem:[%s792] sm:$0x1] %vm1883, %v1880
        $region108: #{tpu_custom_call.1} parent=99 // pred_fallthru
          _
        %s1885 = sand.u32 %s544, 1
        %s1886 = scalar_lea.sflag [#allocation4], %s1885
        %s1887 = sand.u32 %s544, 1
        %s1888 = scalar_lea.vmem [#allocation3], %s1887
        // Predicated region
        $region109: #{tpu_custom_call.1} parent=99 // pred_check
          %p1889 = pneg %p554
        $region110: #{tpu_custom_call.1} parent=99 // pred_check_branch
          %1891 = sbr.rel (%p1889) target = $region112
        $region111: #{tpu_custom_call.1} parent=99 // pred_region
          %1893 = vsyncadd %s1886, 0
          %s1894 = scalar_lea.hbm %s20, %s38
          %s1896 = sshll.u32 %s1888, 4
          %s1897 = int_to_ptr.vmem [resolvable:$true] %s1896
          %s1898 = sshll.u32 %s1894, 4
          %s1899 = int_to_ptr.hbm [resolvable:$true] %s1898
          %1901 = dma.vmem_to_hbm [thread:$0]  %s1897, 16, %s1899, %s1886
        $region112: #{tpu_custom_call.1} parent=99 // pred_fallthru
          _
      $region100: #{tpu_custom_call.1} parent=5 // pred_fallthru
        _
      %p1902 = scmp.le.s32.totalorder 2, %s29
      // Predicated region
      $region113: #{tpu_custom_call.1} parent=5 // pred_check
        %p1903 = pneg %p1902
      $region114: #{tpu_custom_call.1} parent=5 // pred_check_branch
        %1905 = sbr.rel (%p1903) target = $region116
      $region115: #{tpu_custom_call.1} parent=5 // pred_region
        %s1906 = ssub.s32 %s29, 2
        // Predicated region
        $region117: #{tpu_custom_call.1} parent=115 // pred_check
          %p1907 = pneg %p560
        $region118: #{tpu_custom_call.1} parent=115 // pred_check_branch
          %1909 = sbr.rel (%p1907) target = $region120
        $region119: #{tpu_custom_call.1} parent=115 // pred_region
          %s1910 = sand.u32 %s545, 1
          %s1911 = scalar_lea.sflag [#allocation4], %s1910
          %s1912 = sand.u32 %s545, 1
          %s1913 = scalar_lea.vmem [#allocation3], %s1912
          %1915 = dma.done %s1911, 16
        $region120: #{tpu_custom_call.1} parent=115 // pred_fallthru
          _
      $region116: #{tpu_custom_call.1} parent=5 // pred_fallthru
        _
    $region6: #{tpu_custom_call.1} parent=1 // loop_footer
      %s33 = sadd.s32 1, %s29
    $region7: #{tpu_custom_call.1} parent=1 // loop_footer_branch
      %28 = sbr.rel target = $region3
    $region8: #{tpu_custom_call.1} parent=1 // loop_exit
      _
    %1916 = vsyncpa [#allocation4], 1
    %s1917 = scalar_lea.sflag [#allocation4], 1
    %1918 = vsyncpa %s1917, 1

</llo_original>
